<compile_context>
chip_gen: v7x
topology: tpu7x:2x2x1
jax: 0.10.0
libtpu: 0.0.40
codegen_flags: <defaults>
</compile_context>

<pallas_src>
import functools
import math

import jax
import jax.numpy as jnp
from jax.experimental import pallas as pl
from jax.experimental.pallas import tpu as pltpu

LANE = 128


# ----------------------------- Pallas kernel ------------------------------- #

def _sage_conv_kernel(adj_ref, invdeg_ref, xagg_ref, xself_ref, wl_ref, wr_ref,
                      b_ref, out_ref, acc_ref, *, apply_relu):
    """One SAGEConv layer for one (row-tile, reduction-tile) grid point.

    Grid = (rows, reduction); reduction axis is last ("arbitrary").
      adj_ref    : (tm, tk)       int8  edge-count adjacency tile (0/1/...)
      invdeg_ref : (tm, 1)        f32   1 / in_degree for this row tile
      xagg_ref   : (tk, C_in)     bf16  neighbor features (reduction slice)
      xself_ref  : (tm, C_in)     bf16  self features (row slice)
      wl_ref     : (C_in, C_out)  bf16  lin_l weight
      wr_ref     : (C_in, C_out)  bf16  lin_r weight
      b_ref      : (1, C_out)     f32   lin_l bias
      acc_ref    : (tm, C_in)     f32   aggregation accumulator (scratch)
    """
    k = pl.program_id(1)

    @pl.when(k == 0)
    def _init():
        acc_ref[...] = jnp.zeros_like(acc_ref)

    # int8 counts -> bf16 for the MXU; accumulate the exact neighbor sum in f32.
    acc_ref[...] += jnp.dot(adj_ref[...].astype(jnp.bfloat16), xagg_ref[...],
                            preferred_element_type=jnp.float32)

    @pl.when(k == pl.num_programs(1) - 1)
    def _epilogue():
        # Exact f32 mean normalization, then two MXU calls on the same accumulator
        # (no fused [agg | x_self] scratch -> no extra VMEM store/reload).
        agg = (acc_ref[...] * invdeg_ref[...]).astype(wl_ref.dtype)
        h = (jnp.dot(agg, wl_ref[...], preferred_element_type=jnp.float32)
             + jnp.dot(xself_ref[...], wr_ref[...],
                       preferred_element_type=jnp.float32)
             + b_ref[...])
        if apply_relu:
            h = jnp.maximum(h, 0.0)
        out_ref[...] = h.astype(out_ref.dtype)


def _vmem_limit_bytes(tm, tk, cin_p, cout_p, out_bytes):
    """Scoped-VMEM request derived from the block shapes (double-buffer aware)."""
    db = 2  # pipelined operands are double-buffered
    live = (
        db * tm * tk * 1                 # adj tile (int8)
        + db * tm * LANE * 4             # inv_deg tile (lane-padded f32)
        + db * tk * cin_p * 2            # neighbor feature tile (bf16)
        + db * tm * cin_p * 2            # self feature tile (bf16)
        + db * 2 * cin_p * cout_p * 2    # W_l + W_r (bf16)
        + db * 8 * cout_p * 4            # bias (sublane-padded f32)
        + db * tm * cout_p * out_bytes   # output tile
        + tm * cin_p * 4                 # f32 accumulator scratch
    )
    return int(min(max(2 * live, 16 * 1024 * 1024), 64 * 1024 * 1024))


def _sage_conv(adj, inv_deg, x, wl, wr, b, *, apply_relu, out_dtype, tm, tk):
    """adj: (Np, Np) int8, inv_deg: (Np, 1) f32, x: (Np, Cin) bf16,
    wl/wr: (Cin, Cout) bf16, b: (1, Cout) f32."""
    n_p, cin_p = x.shape
    cout_p = wl.shape[1]
    assert n_p % tm == 0 and n_p % tk == 0, (n_p, tm, tk)
    grid = (n_p // tm, n_p // tk)

    kernel = functools.partial(_sage_conv_kernel, apply_relu=apply_relu)
    vmem_limit = _vmem_limit_bytes(tm, tk, cin_p, cout_p,
                                   jnp.dtype(out_dtype).itemsize)

    return pl.pallas_call(
        kernel,
        out_shape=jax.ShapeDtypeStruct((n_p, cout_p), out_dtype),
        grid_spec=pltpu.PrefetchScalarGridSpec(
            num_scalar_prefetch=0,
            grid=grid,
            in_specs=[
                pl.BlockSpec((tm, tk), lambda i, k: (i, k)),           # adj tile
                pl.BlockSpec((tm, 1), lambda i, k: (i, 0)),            # inv_deg
                pl.BlockSpec((tk, cin_p), lambda i, k: (k, 0)),        # neighbor feats
                pl.BlockSpec((tm, cin_p), lambda i, k: (i, 0)),        # self feats
                pl.BlockSpec((cin_p, cout_p), lambda i, k: (0, 0)),    # W_l
                pl.BlockSpec((cin_p, cout_p), lambda i, k: (0, 0)),    # W_r
                pl.BlockSpec((1, cout_p), lambda i, k: (0, 0)),        # bias
            ],
            out_specs=pl.BlockSpec((tm, cout_p), lambda i, k: (i, 0)),
            scratch_shapes=[
                pltpu.VMEM((tm, cin_p), jnp.float32),  # f32 aggregation accumulator
            ],
        ),
        compiler_params=pltpu.CompilerParams(
            dimension_semantics=("parallel", "arbitrary"),
            vmem_limit_bytes=vmem_limit,
        ),
    )(adj, inv_deg, x, x, wl, wr, b)


# ------------------------------- Wrapper ------------------------------------ #

def _round_up(n, m):
    return ((n + m - 1) // m) * m


def _pad2(a, rows, cols):
    return jnp.pad(a, ((0, rows - a.shape[0]), (0, cols - a.shape[1])))


def _pick_tiles(n, tm_req, tk_req):
    """Clamp requested tiles to the graph, keep >=2 row tiles for megacore,
    and pad N to lcm(tm, tk) so both grid axes divide evenly."""
    n128 = _round_up(n, LANE)
    tm = min(_round_up(max(tm_req, LANE), LANE), n128)
    tk = min(_round_up(max(tk_req, LANE), LANE), n128)
    if n128 >= 2 * LANE:
        half = max(LANE, (n128 // 2) // LANE * LANE)
        tm = min(tm, half)                      # v7x: both TensorCores get rows
    n_p = _round_up(n128, math.lcm(tm, tk))
    return n_p, tm, tk


def graphsage_forward(adj_counts, inv_deg, x, wl1, wr1, b1, wl2, wr2, b2, *,
                      tm=512, tk=512):
    """Full GraphSAGE.forward (eval mode) via two tiled Pallas SAGEConv kernels."""
    n, cin = x.shape
    hid = wl1.shape[1]
    cout = wl2.shape[1]

    n_p, tm_eff, tk_eff = _pick_tiles(n, tm, tk)
    cin_p = _round_up(cin, LANE)
    hid_p = _round_up(hid, LANE)
    cout_p = _round_up(cout, LANE)

    # int8 edge-count adjacency (1 byte/elem over HBM) + exact f32 inv_deg;
    # zero padding keeps real rows/channels unaffected.
    adj_i8 = _pad2(adj_counts, n_p, n_p).astype(jnp.int8)
    invd_p = _pad2(inv_deg, n_p, 1).astype(jnp.float32)
    x_b = _pad2(x, n_p, cin_p).astype(jnp.bfloat16)

    wl1_p = _pad2(wl1, cin_p, hid_p).astype(jnp.bfloat16)
    wr1_p = _pad2(wr1, cin_p, hid_p).astype(jnp.bfloat16)
    b1_p = _pad2(b1, 1, hid_p).astype(jnp.float32)
    wl2_p = _pad2(wl2, hid_p, cout_p).astype(jnp.bfloat16)
    wr2_p = _pad2(wr2, hid_p, cout_p).astype(jnp.bfloat16)
    b2_p = _pad2(b2, 1, cout_p).astype(jnp.float32)

    # conv1 -> ReLU (dropout p=0.5 is identity in eval mode); bf16 output for conv2.
    h_b = _sage_conv(adj_i8, invd_p, x_b, wl1_p, wr1_p, b1_p, apply_relu=True,
                     out_dtype=jnp.bfloat16, tm=tm_eff, tk=tk_eff)
    # conv2 -> f32 logits.
    out = _sage_conv(adj_i8, invd_p, h_b, wl2_p, wr2_p, b2_p, apply_relu=False,
                     out_dtype=jnp.float32, tm=tm_eff, tk=tk_eff)
    return out[:n, :cout]


def build_adjacency(edge_index, num_nodes):
    """Dense edge-count adjacency A[dst, src] = #edges(src->dst) and 1/in_degree.

    Counts (not 0/1) so duplicate edges contribute like PyG scatter-mean; they
    stay small integers (exact in int8/bf16)."""
    src, dst = edge_index[0], edge_index[1]
    a = jnp.zeros((num_nodes, num_nodes), jnp.float32).at[dst, src].add(1.0)
    deg = jnp.maximum(a.sum(axis=1, keepdims=True), 1.0)
    return a, 1.0 / deg


def reference_forward(adj_counts, inv_deg, x, wl1, wr1, b1, wl2, wr2, b2):
    """Pure-JAX reference applying the same bf16/f32 mixed precision as the kernels."""
    bf16, f32 = jnp.bfloat16, jnp.float32
    adj_b = adj_counts.astype(bf16)   # small integer counts: exact in bf16
    x_b = x.astype(bf16)

    agg1 = jnp.dot(adj_b, x_b, preferred_element_type=f32) * inv_deg
    h = jnp.maximum(
        jnp.dot(agg1.astype(bf16), wl1.astype(bf16), preferred_element_type=f32)
        + jnp.dot(x_b, wr1.astype(bf16), preferred_element_type=f32) + b1, 0.0)

    h_b = h.astype(bf16)
    agg2 = jnp.dot(adj_b, h_b, preferred_element_type=f32) * inv_deg
    return (jnp.dot(agg2.astype(bf16), wl2.astype(bf16), preferred_element_type=f32)
            + jnp.dot(h_b, wr2.astype(bf16), preferred_element_type=f32) + b2)


# --------------------------------- Test ------------------------------------- #

if __name__ == "__main__":
    # Small but multi-tile shapes: N=200 pads to 256.
    num_nodes = 200
    in_channels = 12
    hidden_channels = 24
    out_channels = 8
    num_edges = 600

    key = jax.random.PRNGKey(0)
    k_x, k_e, k1, k2, k3, k4, k5, k6 = jax.random.split(key, 8)

    x = jax.random.normal(k_x, (num_nodes, in_channels), jnp.float32)
    edge_index = jax.random.randint(k_e, (2, num_edges), 0, num_nodes, jnp.int32)

    def init(k, shape, fan_in):
        return (jax.random.uniform(k, shape, jnp.float32, -1.0, 1.0)
                / jnp.sqrt(jnp.float32(fan_in)))

    wl1 = init(k1, (in_channels, hidden_channels), in_channels)       # conv1.lin_l
    wr1 = init(k2, (in_channels, hidden_channels), in_channels)       # conv1.lin_r
    b1 = init(k5, (1, hidden_channels), in_channels)                  # conv1.lin_l bias
    wl2 = init(k3, (hidden_channels, out_channels), hidden_channels)  # conv2.lin_l
    wr2 = init(k4, (hidden_channels, out_channels), hidden_channels)  # conv2.lin_r
    b2 = init(k6, (1, out_channels), hidden_channels)                 # conv2.lin_l bias

    adj_counts, inv_deg = build_adjacency(edge_index, num_nodes)
    ref = reference_forward(adj_counts, inv_deg, x, wl1, wr1, b1, wl2, wr2, b2)

    # Two tile configs: defaults (large tiles, clamped for the small graph ->
    # grid (2, 1)) and 128x128 (exercises the multi-step k-reduction, grid (2, 2)).
    for cfg in (dict(), dict(tm=128, tk=128)):
        out = graphsage_forward(adj_counts, inv_deg, x,
                                wl1, wr1, b1, wl2, wr2, b2, **cfg)
        out = jax.block_until_ready(out)
        assert out.shape == (num_nodes, out_channels)
        # bf16 feature/weight path in both kernel and reference -> bf16 tolerance.
        assert jnp.allclose(out, ref, atol=1e-2, rtol=1e-2), (
            cfg, float(jnp.max(jnp.abs(out - ref))))

    print("KERNEL_OK")
</pallas_src>

<mosaic_0001>
module attributes {stable_mosaic.version = 11 : i64} {
  func.func @_sage_conv_kernel(%arg0: i32, %arg1: i32, %arg2: memref<128x256xi8, #tpu.memory_space<vmem>>, %arg3: memref<128x1xf32, #tpu.memory_space<vmem>>, %arg4: memref<256x128xbf16, #tpu.memory_space<vmem>>, %arg5: memref<128x128xbf16, #tpu.memory_space<vmem>>, %arg6: memref<128x128xbf16, #tpu.memory_space<vmem>>, %arg7: memref<128x128xbf16, #tpu.memory_space<vmem>>, %arg8: memref<1x128xf32, #tpu.memory_space<vmem>>, %arg9: memref<128x128xbf16, #tpu.memory_space<vmem>>, %arg10: memref<128x128xf32, #tpu.memory_space<vmem>>) attributes {dimension_semantics = [#tpu.dimension_semantics<parallel>, #tpu.dimension_semantics<arbitrary>], iteration_bounds = array<i64: 2, 1>, scalar_prefetch = 0 : i64, scratch_operands = 1 : i64, tpu.core_type = #tpu.core_type<tc>, window_params = [{transform_indices = @transform_0, window_bounds = array<i64: 128, 256>}, {transform_indices = @transform_1, window_bounds = array<i64: 128, 1>}, {transform_indices = @transform_2, window_bounds = array<i64: 256, 128>}, {transform_indices = @transform_3, window_bounds = array<i64: 128, 128>}, {pipeline_mode = #tpu.pipeline_mode<synchronous>, transform_indices = @transform_4, window_bounds = array<i64: 128, 128>}, {pipeline_mode = #tpu.pipeline_mode<synchronous>, transform_indices = @transform_5, window_bounds = array<i64: 128, 128>}, {pipeline_mode = #tpu.pipeline_mode<synchronous>, transform_indices = @transform_6, window_bounds = array<i64: 1, 128>}, {transform_indices = @transform_7, window_bounds = array<i64: 128, 128>}]} {
    %c0_i32 = arith.constant 0 : i32
    %0 = arith.cmpi eq, %arg1, %c0_i32 : i32
    %1 = arith.extui %0 : i1 to i32
    %c0_i32_0 = arith.constant 0 : i32
    %2 = arith.cmpi ne, %1, %c0_i32_0 : i32
    scf.if %2 {
      %cst_10 = arith.constant 0.000000e+00 : f32
      %13 = vector.broadcast %cst_10 : f32 to vector<128x128xf32>
      %c0_11 = arith.constant 0 : index
      %c0_12 = arith.constant 0 : index
      %14 = vector.load %arg10[%c0_11, %c0_12] : memref<128x128xf32, #tpu.memory_space<vmem>>, vector<128x128xf32>
      tpu.vector_store %arg10[%c0_11, %c0_12], %13 {strides = array<i32>} : memref<128x128xf32, #tpu.memory_space<vmem>>, vector<128x128xf32>,
    } else {
    }
    %c0 = arith.constant 0 : index
    %c0_1 = arith.constant 0 : index
    %3 = vector.load %arg10[%c0, %c0_1] : memref<128x128xf32, #tpu.memory_space<vmem>>, vector<128x128xf32>
    %c0_2 = arith.constant 0 : index
    %c0_3 = arith.constant 0 : index
    %4 = vector.load %arg2[%c0_2, %c0_3] : memref<128x256xi8, #tpu.memory_space<vmem>>, vector<128x256xi8>
    %5 = arith.sitofp %4 : vector<128x256xi8> to vector<128x256xbf16>
    %c0_4 = arith.constant 0 : index
    %c0_5 = arith.constant 0 : index
    %6 = vector.load %arg4[%c0_4, %c0_5] : memref<256x128xbf16, #tpu.memory_space<vmem>>, vector<256x128xbf16>
    %cst = arith.constant dense<0.000000e+00> : vector<128x128xf32>
    %7 = tpu.matmul %5, %6, %cst {dimension_numbers = #tpu.dot_dimension_numbers<[1], [0], [0], [1], [0, 0, 1, 1], [], []>} : vector<128x256xbf16>, vector<256x128xbf16>, vector<128x128xf32> -> vector<128x128xf32>
    %8 = arith.addf %3, %7 : vector<128x128xf32>
    %c0_6 = arith.constant 0 : index
    %c0_7 = arith.constant 0 : index
    %9 = vector.load %arg10[%c0_6, %c0_7] : memref<128x128xf32, #tpu.memory_space<vmem>>, vector<128x128xf32>
    tpu.vector_store %arg10[%c0_6, %c0_7], %8 {strides = array<i32>} : memref<128x128xf32, #tpu.memory_space<vmem>>, vector<128x128xf32>,
    %c0_i32_8 = arith.constant 0 : i32
    %10 = arith.cmpi eq, %arg1, %c0_i32_8 : i32
    %11 = arith.extui %10 : i1 to i32
    %c0_i32_9 = arith.constant 0 : i32
    %12 = arith.cmpi ne, %11, %c0_i32_9 : i32
    scf.if %12 {
      %c0_10 = arith.constant 0 : index
      %c0_11 = arith.constant 0 : index
      %13 = vector.load %arg10[%c0_10, %c0_11] : memref<128x128xf32, #tpu.memory_space<vmem>>, vector<128x128xf32>
      %c0_12 = arith.constant 0 : index
      %c0_13 = arith.constant 0 : index
      %14 = vector.load %arg3[%c0_12, %c0_13] : memref<128x1xf32, #tpu.memory_space<vmem>>, vector<128x1xf32>
      %15 = vector.broadcast %14 : vector<128x1xf32> to vector<128x128xf32>
      %16 = arith.mulf %13, %15 : vector<128x128xf32>
      %17 = arith.truncf %16 : vector<128x128xf32> to vector<128x128xbf16>
      %c0_14 = arith.constant 0 : index
      %c0_15 = arith.constant 0 : index
      %18 = vector.load %arg6[%c0_14, %c0_15] : memref<128x128xbf16, #tpu.memory_space<vmem>>, vector<128x128xbf16>
      %cst_16 = arith.constant dense<0.000000e+00> : vector<128x128xf32>
      %19 = tpu.matmul %17, %18, %cst_16 {dimension_numbers = #tpu.dot_dimension_numbers<[1], [0], [0], [1], [0, 0, 1, 1], [], []>} : vector<128x128xbf16>, vector<128x128xbf16>, vector<128x128xf32> -> vector<128x128xf32>
      %c0_17 = arith.constant 0 : index
      %c0_18 = arith.constant 0 : index
      %20 = vector.load %arg5[%c0_17, %c0_18] : memref<128x128xbf16, #tpu.memory_space<vmem>>, vector<128x128xbf16>
      %c0_19 = arith.constant 0 : index
      %c0_20 = arith.constant 0 : index
      %21 = vector.load %arg7[%c0_19, %c0_20] : memref<128x128xbf16, #tpu.memory_space<vmem>>, vector<128x128xbf16>
      %cst_21 = arith.constant dense<0.000000e+00> : vector<128x128xf32>
      %22 = tpu.matmul %20, %21, %cst_21 {dimension_numbers = #tpu.dot_dimension_numbers<[1], [0], [0], [1], [0, 0, 1, 1], [], []>} : vector<128x128xbf16>, vector<128x128xbf16>, vector<128x128xf32> -> vector<128x128xf32>
      %23 = arith.addf %19, %22 : vector<128x128xf32>
      %c0_22 = arith.constant 0 : index
      %c0_23 = arith.constant 0 : index
      %24 = vector.load %arg8[%c0_22, %c0_23] : memref<1x128xf32, #tpu.memory_space<vmem>>, vector<1x128xf32>
      %25 = vector.broadcast %24 : vector<1x128xf32> to vector<128x128xf32>
      %26 = arith.addf %23, %25 : vector<128x128xf32>
      %cst_24 = arith.constant 0.000000e+00 : f32
      %27 = vector.broadcast %cst_24 : f32 to vector<128x128xf32>
      %28 = arith.maximumf %26, %27 : vector<128x128xf32>
      %29 = arith.truncf %28 : vector<128x128xf32> to vector<128x128xbf16>
      %c0_25 = arith.constant 0 : index
      %c0_26 = arith.constant 0 : index
      %30 = vector.load %arg9[%c0_25, %c0_26] : memref<128x128xbf16, #tpu.memory_space<vmem>>, vector<128x128xbf16>
      tpu.vector_store %arg9[%c0_25, %c0_26], %29 {strides = array<i32>} : memref<128x128xbf16, #tpu.memory_space<vmem>>, vector<128x128xbf16>,
    } else {
    }
    return
  }
  func.func @transform_0(%arg0: i32, %arg1: i32) -> (i32, i32) {
    %c0_i32 = arith.constant 0 : i32
    return %arg0, %arg1 : i32, i32
  }
  func.func @transform_1(%arg0: i32, %arg1: i32) -> (i32, i32) {
    %c0_i32 = arith.constant 0 : i32
    %c0_i32_0 = arith.constant 0 : i32
    return %arg0, %c0_i32 : i32, i32
  }
  func.func @transform_2(%arg0: i32, %arg1: i32) -> (i32, i32) {
    %c0_i32 = arith.constant 0 : i32
    %c0_i32_0 = arith.constant 0 : i32
    return %arg1, %c0_i32 : i32, i32
  }
  func.func @transform_3(%arg0: i32, %arg1: i32) -> (i32, i32) {
    %c0_i32 = arith.constant 0 : i32
    %c0_i32_0 = arith.constant 0 : i32
    return %arg0, %c0_i32 : i32, i32
  }
  func.func @transform_4(%arg0: i32, %arg1: i32) -> (i32, i32) {
    %c0_i32 = arith.constant 0 : i32
    %c0_i32_0 = arith.constant 0 : i32
    %c0_i32_1 = arith.constant 0 : i32
    return %c0_i32, %c0_i32_0 : i32, i32
  }
  func.func @transform_5(%arg0: i32, %arg1: i32) -> (i32, i32) {
    %c0_i32 = arith.constant 0 : i32
    %c0_i32_0 = arith.constant 0 : i32
    %c0_i32_1 = arith.constant 0 : i32
    return %c0_i32, %c0_i32_0 : i32, i32
  }
  func.func @transform_6(%arg0: i32, %arg1: i32) -> (i32, i32) {
    %c0_i32 = arith.constant 0 : i32
    %c0_i32_0 = arith.constant 0 : i32
    %c0_i32_1 = arith.constant 0 : i32
    return %c0_i32, %c0_i32_0 : i32, i32
  }
  func.func @transform_7(%arg0: i32, %arg1: i32) -> (i32, i32) {
    %c0_i32 = arith.constant 0 : i32
    %c0_i32_0 = arith.constant 0 : i32
    return %arg0, %c0_i32 : i32, i32
  }
}

</mosaic_0001>

<llo_original>
// kernel: tpu_custom_call.1
$region0: #{tpu_custom_call.1}
  #allocation0 [shape = 'u32[]', space=smem, size = 0x4, offset = 0x4, fixed_abs, tag = 'smem constant byte address 0x4 - core index']
  #allocation1 [shape = 'u32[144,128]{1,0:T(1,128)}', space=vmem, size = 0x12000, scoped, tag = 'internal scratch']
  #allocation2 [shape = 'f32[128,128]{1,0:T(8,128)}', space=vmem, size = 0x10000, scoped, tag = 'scratch operand']
  %s0 = inlined_call_operand.vmem [shape: s8[256,256], index: 0, kind: input, shape index: {}]
  %s1 = inlined_call_operand.vmem [shape: f32[256,1], index: 1, kind: input, shape index: {}]
  %s2 = inlined_call_operand.vmem [shape: bf16[256,128], index: 2, kind: input, shape index: {}]
  %s3 = inlined_call_operand.hbm [shape: bf16[256,128], index: 3, kind: input, shape index: {}]
  %s4 = inlined_call_operand.hbm [shape: bf16[128,128], index: 4, kind: input, shape index: {}]
  %s5 = inlined_call_operand.hbm [shape: bf16[128,128], index: 5, kind: input, shape index: {}]
  %s6 = inlined_call_operand.vmem [shape: f32[1,128], index: 6, kind: input, shape index: {}]
  %s7 = inlined_call_operand.hbm [shape: bf16[256,128], index: 7, kind: output, shape index: {}]
  %s8 = sld [smem:[#allocation0]]
  $region81: #{tpu_custom_call.1} parent=0
    _
  %s10 = ssub.s32 1, %s8
  %s11 = scalar_select 0, %s10, %s8
  $region1: #{tpu_custom_call.1} parent=0
    #allocation3 [shape = 'u8[65536]{0}', space=vmem, size = 0x10000, scoped, tag = 'input window, operand 3']
    #allocation4 [shape = 's32[2]{0}', space=sflag, size = 0x8, scoped, tag = 'scoped memory for tpu_custom_call.1']
    #allocation5 [shape = 's32[2]{0}', space=sflag, size = 0x8, scoped, tag = 'scoped memory for tpu_custom_call.1']
    #allocation6 [shape = 'u8[32768]{0}', space=vmem, size = 0x8000, scoped, tag = 'input window, operand 4, single buffered']
    #allocation7 [shape = 's32[1]{0}', space=sflag, size = 0x4, scoped, tag = 'scoped memory for tpu_custom_call.1']
    #allocation8 [shape = 'u8[32768]{0}', space=vmem, size = 0x8000, scoped, tag = 'input window, operand 5, single buffered']
    #allocation9 [shape = 'u8[65536]{0}', space=vmem, size = 0x10000, scoped, tag = 'output window, operand 0']
    %12 = vsyncpa [#allocation4], 0
    %s13 = scalar_lea.sflag [#allocation4], 1
    %14 = vsyncpa %s13, 0
    %15 = vsyncpa [#allocation7], 0
    %16 = vsyncpa [#allocation5], 0
    %s17 = scalar_lea.sflag [#allocation5], 1
    %18 = vsyncpa %s17, 0
    loop: start=0, step=1, limit=4
    $region2: #{tpu_custom_call.1} parent=1 // loop_pre_header
      _
    $region3: #{tpu_custom_call.1} parent=1 // loop_header
      %s20 = sphi 0, %s24
      %p21 = scmp.ge.s32.totalorder %s20, 4
      %s27 = sphi 0, %s39
      %s28 = sphi 0, %s35
      %s29 = sphi 0, %s27
      %s30 = sphi 0, %s28
      %s31 = sphi 0, %s29
      %s32 = sphi 0, %s30
      %s44 = sphi 0, %s46
      %s47 = sphi 0, %s44
      %s48 = sphi 0, %s47
      %s64 = sphi 0, %s48
      %s70 = sphi 0, %s72
      %s73 = sphi 0, %s70
      %s74 = sphi 0, %s73
      %s90 = sphi 0, %s74
      %s96 = sphi 0, %s98
      %s99 = sphi 0, %s96
      %s100 = sphi 0, %s99
      %s116 = sphi 0, %s100
      %s122 = sphi 0, %s124
      %s125 = sphi 0, %s122
      %s126 = sphi 0, %s125
      %s142 = sphi 0, %s126
      %s146 = sphi 0, %s146
      %s148 = sphi 0, %s146
      %s149 = sphi 0, %s148
      %s163 = sphi 0, %s149
      %s167 = sphi 0, %s167
      %s169 = sphi 0, %s167
      %s170 = sphi 0, %s169
      %s184 = sphi 0, %s170
      %s188 = sphi 0, %s188
      %s190 = sphi 0, %s188
      %s191 = sphi 0, %s190
      %s205 = sphi 0, %s191
      %s211 = sphi 0, %s213
      %s214 = sphi 0, %s211
      %s215 = sphi 0, %s214
      %s231 = sphi 0, %s215
    $region4: #{tpu_custom_call.1} parent=1 // loop_header_branch
      %23 = sbr.rel (%p21) target = $region8
    $region5: #{tpu_custom_call.1} parent=1 // loop_body
      %s25 = ssub.s32 %s20, 1
      %s26 = ssub.s32 %s20, 2
      %s33 = sadd.s32 1, %s28
      %p34 = scmp.ge.s32.totalorder %s33, 1
      %s35 = scalar_select %p34, 0, %s33
      %s36 = sadd.s32 1, %s27
      %s37 = scalar_select %p34, %s36, %s27
      %p38 = scmp.ge.s32.totalorder %s37, 2
      %s39 = scalar_select %p38, 0, %s37
      %s40 = ssub.s32 %s27, %s39
      %s41 = ssub.s32 %s28, %s35
      %s42 = sor.u32 %s40, %s41
      %p43 = scmp.eq.s32.totalorder %s42, 0
      %s45 = sadd.s32 %s44, 1
      %s46 = scalar_select %p43, %s44, %s45
      %p49 = pneg %p43
      %p50 = scmp.eq.s32.totalorder %s20, 1
      %p51 = por %p49, %p50
      %p52 = scmp.ne.s32.totalorder %s44, %s47
      %p53 = scmp.eq.s32.totalorder %s20, 0
      %p54 = por %p52, %p53
      %p55 = scmp.ne.s32.totalorder %s44, %s47
      %p56 = scmp.eq.s32.totalorder %s25, 1
      %p57 = por %p55, %p56
      %p58 = scmp.ne.s32.totalorder %s47, %s48
      %p59 = scmp.eq.s32.totalorder %s25, 0
      %p60 = por %p58, %p59
      %p61 = scmp.ne.s32.totalorder %s47, %s48
      %p62 = scmp.eq.s32.totalorder %s26, 1
      %p63 = por %p61, %p62
      %p65 = scmp.ne.s32.totalorder %s48, %s64
      %p66 = scmp.eq.s32.totalorder %s26, 0
      %p67 = por %p65, %p66
      %s68 = ssub.s32 %s27, %s39
      %p69 = scmp.eq.s32.totalorder %s68, 0
      %s71 = sadd.s32 %s70, 1
      %s72 = scalar_select %p69, %s70, %s71
      %p75 = pneg %p69
      %p76 = scmp.eq.s32.totalorder %s20, 1
      %p77 = por %p75, %p76
      %p78 = scmp.ne.s32.totalorder %s70, %s73
      %p79 = scmp.eq.s32.totalorder %s20, 0
      %p80 = por %p78, %p79
      %p81 = scmp.ne.s32.totalorder %s70, %s73
      %p82 = scmp.eq.s32.totalorder %s25, 1
      %p83 = por %p81, %p82
      %p84 = scmp.ne.s32.totalorder %s73, %s74
      %p85 = scmp.eq.s32.totalorder %s25, 0
      %p86 = por %p84, %p85
      %p87 = scmp.ne.s32.totalorder %s73, %s74
      %p88 = scmp.eq.s32.totalorder %s26, 1
      %p89 = por %p87, %p88
      %p91 = scmp.ne.s32.totalorder %s74, %s90
      %p92 = scmp.eq.s32.totalorder %s26, 0
      %p93 = por %p91, %p92
      %s94 = ssub.s32 %s28, %s35
      %p95 = scmp.eq.s32.totalorder %s94, 0
      %s97 = sadd.s32 %s96, 1
      %s98 = scalar_select %p95, %s96, %s97
      %p101 = pneg %p95
      %p102 = scmp.eq.s32.totalorder %s20, 1
      %p103 = por %p101, %p102
      %p104 = scmp.ne.s32.totalorder %s96, %s99
      %p105 = scmp.eq.s32.totalorder %s20, 0
      %p106 = por %p104, %p105
      %p107 = scmp.ne.s32.totalorder %s96, %s99
      %p108 = scmp.eq.s32.totalorder %s25, 1
      %p109 = por %p107, %p108
      %p110 = scmp.ne.s32.totalorder %s99, %s100
      %p111 = scmp.eq.s32.totalorder %s25, 0
      %p112 = por %p110, %p111
      %p113 = scmp.ne.s32.totalorder %s99, %s100
      %p114 = scmp.eq.s32.totalorder %s26, 1
      %p115 = por %p113, %p114
      %p117 = scmp.ne.s32.totalorder %s100, %s116
      %p118 = scmp.eq.s32.totalorder %s26, 0
      %p119 = por %p117, %p118
      %s120 = ssub.s32 %s27, %s39
      %p121 = scmp.eq.s32.totalorder %s120, 0
      %s123 = sadd.s32 %s122, 1
      %s124 = scalar_select %p121, %s122, %s123
      %p127 = pneg %p121
      %p128 = scmp.eq.s32.totalorder %s20, 1
      %p129 = por %p127, %p128
      %p130 = scmp.ne.s32.totalorder %s122, %s125
      %p131 = scmp.eq.s32.totalorder %s20, 0
      %p132 = por %p130, %p131
      %p133 = scmp.ne.s32.totalorder %s122, %s125
      %p134 = scmp.eq.s32.totalorder %s25, 1
      %p135 = por %p133, %p134
      %p136 = scmp.ne.s32.totalorder %s125, %s126
      %p137 = scmp.eq.s32.totalorder %s25, 0
      %p138 = por %p136, %p137
      %p139 = scmp.ne.s32.totalorder %s125, %s126
      %p140 = scmp.eq.s32.totalorder %s26, 1
      %p141 = por %p139, %p140
      %p143 = scmp.ne.s32.totalorder %s126, %s142
      %p144 = scmp.eq.s32.totalorder %s26, 0
      %p145 = por %p143, %p144
      %s147 = sadd.s32 %s146, 1
      %p150 = scmp.eq.s32.totalorder %s20, 1
      %p151 = scmp.ne.s32.totalorder %s146, %s148
      %p152 = scmp.eq.s32.totalorder %s20, 0
      %p153 = por %p151, %p152
      %p154 = scmp.ne.s32.totalorder %s146, %s148
      %p155 = scmp.eq.s32.totalorder %s25, 1
      %p156 = por %p154, %p155
      %p157 = scmp.ne.s32.totalorder %s148, %s149
      %p158 = scmp.eq.s32.totalorder %s25, 0
      %p159 = por %p157, %p158
      %p160 = scmp.ne.s32.totalorder %s148, %s149
      %p161 = scmp.eq.s32.totalorder %s26, 1
      %p162 = por %p160, %p161
      %p164 = scmp.ne.s32.totalorder %s149, %s163
      %p165 = scmp.eq.s32.totalorder %s26, 0
      %p166 = por %p164, %p165
      %s168 = sadd.s32 %s167, 1
      %p171 = scmp.eq.s32.totalorder %s20, 1
      %p172 = scmp.ne.s32.totalorder %s167, %s169
      %p173 = scmp.eq.s32.totalorder %s20, 0
      %p174 = por %p172, %p173
      %p175 = scmp.ne.s32.totalorder %s167, %s169
      %p176 = scmp.eq.s32.totalorder %s25, 1
      %p177 = por %p175, %p176
      %p178 = scmp.ne.s32.totalorder %s169, %s170
      %p179 = scmp.eq.s32.totalorder %s25, 0
      %p180 = por %p178, %p179
      %p181 = scmp.ne.s32.totalorder %s169, %s170
      %p182 = scmp.eq.s32.totalorder %s26, 1
      %p183 = por %p181, %p182
      %p185 = scmp.ne.s32.totalorder %s170, %s184
      %p186 = scmp.eq.s32.totalorder %s26, 0
      %p187 = por %p185, %p186
      %s189 = sadd.s32 %s188, 1
      %p192 = scmp.eq.s32.totalorder %s20, 1
      %p193 = scmp.ne.s32.totalorder %s188, %s190
      %p194 = scmp.eq.s32.totalorder %s20, 0
      %p195 = por %p193, %p194
      %p196 = scmp.ne.s32.totalorder %s188, %s190
      %p197 = scmp.eq.s32.totalorder %s25, 1
      %p198 = por %p196, %p197
      %p199 = scmp.ne.s32.totalorder %s190, %s191
      %p200 = scmp.eq.s32.totalorder %s25, 0
      %p201 = por %p199, %p200
      %p202 = scmp.ne.s32.totalorder %s190, %s191
      %p203 = scmp.eq.s32.totalorder %s26, 1
      %p204 = por %p202, %p203
      %p206 = scmp.ne.s32.totalorder %s191, %s205
      %p207 = scmp.eq.s32.totalorder %s26, 0
      %p208 = por %p206, %p207
      %s209 = ssub.s32 %s27, %s39
      %p210 = scmp.eq.s32.totalorder %s209, 0
      %s212 = sadd.s32 %s211, 1
      %s213 = scalar_select %p210, %s211, %s212
      %p216 = pneg %p210
      %p217 = scmp.eq.s32.totalorder %s20, 1
      %p218 = por %p216, %p217
      %p219 = scmp.ne.s32.totalorder %s211, %s214
      %p220 = scmp.eq.s32.totalorder %s20, 0
      %p221 = por %p219, %p220
      %p222 = scmp.ne.s32.totalorder %s211, %s214
      %p223 = scmp.eq.s32.totalorder %s25, 1
      %p224 = por %p222, %p223
      %p225 = scmp.ne.s32.totalorder %s214, %s215
      %p226 = scmp.eq.s32.totalorder %s25, 0
      %p227 = por %p225, %p226
      %p228 = scmp.ne.s32.totalorder %s214, %s215
      %p229 = scmp.eq.s32.totalorder %s26, 1
      %p230 = por %p228, %p229
      %p232 = scmp.ne.s32.totalorder %s215, %s231
      %p233 = scmp.eq.s32.totalorder %s26, 0
      %p234 = por %p232, %p233
      %p235 = scmp.le.s32.totalorder 1, %s20
      %p236 = scmp.lt.s32.totalorder %s20, 3
      %p237 = pnand %p235, %p236
      %p238 = pneg %p237
      // Predicated region
      $region9: #{tpu_custom_call.1} parent=5 // pred_check
        _
      $region10: #{tpu_custom_call.1} parent=5 // pred_check_branch
        %240 = sbr.rel (%p237) target = $region12
      $region11: #{tpu_custom_call.1} parent=5 // pred_region
        %s241 = ssub.s32 %s20, 1
        // Predicated region
        $region13: #{tpu_custom_call.1} parent=11 // pred_check
          %p242 = pneg %p112
        $region14: #{tpu_custom_call.1} parent=11 // pred_check_branch
          %244 = sbr.rel (%p242) target = $region16
        $region15: #{tpu_custom_call.1} parent=11 // pred_region
          %s245 = smul.u32 32, %s30
          %p246 = scmp.lt.s32.totalorder %s245, 31
          %s247 = scalar_select %p246, %s245, 31
          %s248 = smul.addr %s247, 4
          %s249 = scalar_lea.vmem %s2, %s248
          %s250 = smul.u32 32, %s30
        $region16: #{tpu_custom_call.1} parent=11 // pred_fallthru
          _
        // Predicated region
        $region17: #{tpu_custom_call.1} parent=11 // pred_check
          %p251 = pneg %p159
        $region18: #{tpu_custom_call.1} parent=11 // pred_check_branch
          %253 = sbr.rel (%p251) target = $region20
        $region19: #{tpu_custom_call.1} parent=11 // pred_region
          %s255 = ssub.s32 1024, 1024
          %256 = vsyncadd [#allocation7], %s255
          %s257 = sshll.u32 [#allocation6], 4
          %s258 = int_to_ptr.vmem [resolvable:$true] %s257
          %263 = dma.hbm_to_vmem [thread:$0]  %s4, 1024, %s258, [#allocation7], 64, 64, 4
        $region20: #{tpu_custom_call.1} parent=11 // pred_fallthru
          _
        // Predicated region
        $region21: #{tpu_custom_call.1} parent=11 // pred_check
          %p264 = pneg %p180
        $region22: #{tpu_custom_call.1} parent=11 // pred_check_branch
          %266 = sbr.rel (%p264) target = $region24
        $region23: #{tpu_custom_call.1} parent=11 // pred_region
          %s268 = ssub.s32 1024, 1024
          %269 = vsyncadd [#allocation7], %s268
          %s270 = sshll.u32 [#allocation8], 4
          %s271 = int_to_ptr.vmem [resolvable:$true] %s270
          %276 = dma.hbm_to_vmem [thread:$0]  %s5, 1024, %s271, [#allocation7], 64, 64, 4
        $region24: #{tpu_custom_call.1} parent=11 // pred_fallthru
          _
        // Predicated region
        $region25: #{tpu_custom_call.1} parent=11 // pred_check
          %p277 = pneg %p201
        $region26: #{tpu_custom_call.1} parent=11 // pred_check_branch
          %279 = sbr.rel (%p277) target = $region28
        $region27: #{tpu_custom_call.1} parent=11 // pred_region
          _
        $region28: #{tpu_custom_call.1} parent=11 // pred_fallthru
          _
      $region12: #{tpu_custom_call.1} parent=5 // pred_fallthru
        _
      %p280 = scmp.lt.s32.totalorder %s20, 2
      // Predicated region
      $region29: #{tpu_custom_call.1} parent=5 // pred_check
        %p281 = pneg %p280
      $region30: #{tpu_custom_call.1} parent=5 // pred_check_branch
        %283 = sbr.rel (%p281) target = $region32
      $region31: #{tpu_custom_call.1} parent=5 // pred_region
        // Predicated region
        $region33: #{tpu_custom_call.1} parent=31 // pred_check
          %p284 = pneg %p54
        $region34: #{tpu_custom_call.1} parent=31 // pred_check_branch
          %286 = sbr.rel (%p284) target = $region36
        $region35: #{tpu_custom_call.1} parent=31 // pred_region
          %s287 = smul.u32 4, %s27
          %s288 = smul.u32 2, %s28
          %p289 = scmp.lt.s32.totalorder %s287, 7
          %s290 = scalar_select %p289, %s287, 7
          %p291 = scmp.lt.s32.totalorder %s288, 1
          %s292 = scalar_select %p291, %s288, 1
          %s293 = smul.addr %s290, 2
          %s294 = sadd.s32 %s292, %s293
          %s295 = smul.addr %s294, 8
          %s296 = scalar_lea.vmem %s0, %s295
          %s297 = smul.u32 4, %s27
          %s298 = smul.u32 2, %s28
        $region36: #{tpu_custom_call.1} parent=31 // pred_fallthru
          _
        // Predicated region
        $region37: #{tpu_custom_call.1} parent=31 // pred_check
          %p299 = pneg %p80
        $region38: #{tpu_custom_call.1} parent=31 // pred_check_branch
          %301 = sbr.rel (%p299) target = $region40
        $region39: #{tpu_custom_call.1} parent=31 // pred_region
          %s302 = smul.u32 16, %s27
          %p303 = scmp.lt.s32.totalorder %s302, 31
          %s304 = scalar_select %p303, %s302, 31
          %s305 = smul.addr %s304, 8
          %s306 = scalar_lea.vmem %s1, %s305
          %s307 = smul.u32 16, %s27
        $region40: #{tpu_custom_call.1} parent=31 // pred_fallthru
          _
        // Predicated region
        $region41: #{tpu_custom_call.1} parent=31 // pred_check
          %p308 = pneg %p132
        $region42: #{tpu_custom_call.1} parent=31 // pred_check_branch
          %310 = sbr.rel (%p308) target = $region44
        $region43: #{tpu_custom_call.1} parent=31 // pred_region
          %s311 = sand.u32 %s122, 1
          %s312 = scalar_lea.sflag [#allocation4], %s311
          %s313 = sand.u32 %s122, 1
          %s314 = smul.addr %s313, 64
          %s315 = scalar_lea.vmem [#allocation3], %s314
          %s316 = smul.u32 16, %s27
          %s318 = ssub.s32 1024, 1024
          %319 = vsyncadd %s312, %s318
          %s320 = smul.addr %s316, 64
          %s321 = scalar_lea.hbm %s3, %s320
          %s322 = sshll.u32 %s315, 4
          %s323 = int_to_ptr.vmem [resolvable:$true] %s322
          %328 = dma.hbm_to_vmem [thread:$0]  %s321, 1024, %s323, %s312, 64, 64, 4
        $region44: #{tpu_custom_call.1} parent=31 // pred_fallthru
          _
      $region32: #{tpu_custom_call.1} parent=5 // pred_fallthru
        _
      %p329 = scmp.le.s32.totalorder 1, %s20
      %p330 = scmp.lt.s32.totalorder %s20, 3
      %p331 = pnand %p329, %p330
      %p332 = pneg %p331
      // Predicated region
      $region45: #{tpu_custom_call.1} parent=5 // pred_check
        _
      $region46: #{tpu_custom_call.1} parent=5 // pred_check_branch
        %334 = sbr.rel (%p331) target = $region48
      $region47: #{tpu_custom_call.1} parent=5 // pred_region
        %s335 = ssub.s32 %s20, 1
        %s336 = sand.u32 %s125, 1
        %s337 = scalar_lea.sflag [#allocation4], %s336
        %s338 = sand.u32 %s125, 1
        %s339 = smul.addr %s338, 64
        %s340 = scalar_lea.vmem [#allocation3], %s339
        // Predicated region
        $region49: #{tpu_custom_call.1} parent=47 // pred_check
          %p341 = pneg %p138
        $region50: #{tpu_custom_call.1} parent=47 // pred_check_branch
          %343 = sbr.rel (%p341) target = $region52
        $region51: #{tpu_custom_call.1} parent=47 // pred_region
          %344 = dma.done %s337, 1024
        $region52: #{tpu_custom_call.1} parent=47 // pred_fallthru
          _
        // Predicated region
        $region53: #{tpu_custom_call.1} parent=47 // pred_check
          %p345 = pneg %p159
        $region54: #{tpu_custom_call.1} parent=47 // pred_check_branch
          %347 = sbr.rel (%p345) target = $region56
        $region55: #{tpu_custom_call.1} parent=47 // pred_region
          %348 = dma.done [#allocation7], 1024
        $region56: #{tpu_custom_call.1} parent=47 // pred_fallthru
          _
        // Predicated region
        $region57: #{tpu_custom_call.1} parent=47 // pred_check
          %p349 = pneg %p180
        $region58: #{tpu_custom_call.1} parent=47 // pred_check_branch
          %351 = sbr.rel (%p349) target = $region60
        $region59: #{tpu_custom_call.1} parent=47 // pred_region
          %352 = dma.done [#allocation7], 1024
        $region60: #{tpu_custom_call.1} parent=47 // pred_fallthru
          _
        %s353 = smul.u32 4, %s29
        %s354 = smul.u32 2, %s30
        %p355 = scmp.lt.s32.totalorder %s353, 7
        %s356 = scalar_select %p355, %s353, 7
        %p357 = scmp.lt.s32.totalorder %s354, 1
        %s358 = scalar_select %p357, %s354, 1
        %s359 = smul.addr %s356, 2
        %s360 = sadd.s32 %s358, %s359
        %s361 = smul.addr %s360, 8
        %s362 = scalar_lea.vmem %s0, %s361
        %p363 = pneg %p60
        %p364 = pneg %p57
        %s365 = smul.u32 16, %s29
        %p366 = scmp.lt.s32.totalorder %s365, 31
        %s367 = scalar_select %p366, %s365, 31
        %s368 = smul.addr %s367, 8
        %s369 = scalar_lea.vmem %s1, %s368
        %p370 = pneg %p86
        %p371 = pneg %p83
        %s372 = smul.u32 32, %s30
        %p373 = scmp.lt.s32.totalorder %s372, 31
        %s374 = scalar_select %p373, %s372, 31
        %s375 = smul.addr %s374, 4
        %s376 = scalar_lea.vmem %s2, %s375
        %p377 = pneg %p112
        %p378 = pneg %p109
        %s379 = sand.u32 %s125, 1
        %s380 = scalar_lea.sflag [#allocation4], %s379
        %s381 = sand.u32 %s125, 1
        %s382 = smul.addr %s381, 64
        %s383 = scalar_lea.vmem [#allocation3], %s382
        %p384 = pneg %p138
        %p385 = pneg %p135
        %p386 = pneg %p159
        %p387 = pneg %p156
        %p388 = pneg %p180
        %p389 = pneg %p177
        %p390 = pneg %p201
        %p391 = pneg %p198
        %p392 = pneg %p227
        %p393 = pneg %p224
        %s394 = sand.u32 %s214, 1
        %s395 = scalar_lea.sflag [#allocation5], %s394
        %s396 = sand.u32 %s214, 1
        %s397 = smul.addr %s396, 64
        %s398 = scalar_lea.vmem [#allocation9], %s397
        %s399 = smul.u32 4, %s29
        %s400 = smul.u32 2, %s30
        %p401 = scmp.lt.s32.totalorder %s399, 7
        %s402 = scalar_select %p401, %s399, 7
        %p403 = scmp.lt.s32.totalorder %s400, 1
        %s404 = scalar_select %p403, %s400, 1
        %s405 = smul.addr %s402, 2
        %s406 = sadd.s32 %s404, %s405
        %s407 = smul.addr %s406, 8
        %s408 = scalar_lea.vmem %s0, %s407
        %s409 = smul.u32 4, %s29
        %s410 = smul.u32 2, %s30
        %s411 = smul.u32 16, %s29
        %p412 = scmp.lt.s32.totalorder %s411, 31
        %s413 = scalar_select %p412, %s411, 31
        %s414 = smul.addr %s413, 8
        %s415 = scalar_lea.vmem %s1, %s414
        %s416 = smul.u32 16, %s29
        %s417 = smul.u32 32, %s30
        %p418 = scmp.lt.s32.totalorder %s417, 31
        %s419 = scalar_select %p418, %s417, 31
        %s420 = smul.addr %s419, 4
        %s421 = scalar_lea.vmem %s2, %s420
        %s422 = smul.u32 32, %s30
        %s423 = smul.u32 16, %s29
        %s424 = smul.u32 16, %s29
        %p426 = scmp.eq.s32.totalorder %s30, 0
        // Predicated region
        $region61: #{tpu_custom_call.1} parent=47 // pred_check
          %p427 = pneg %p426
        $region62: #{tpu_custom_call.1} parent=47 // pred_check_branch
          %429 = sbr.rel (%p427) target = $region64
        $region63: #{tpu_custom_call.1} parent=47 // pred_region
          %430 = vst [vmem:[#allocation2] sm:$0xff] 0.0
          %431 = vst [vmem:[#allocation2 + $0x8] sm:$0xff] 0.0
          %432 = vst [vmem:[#allocation2 + $0x10] sm:$0xff] 0.0
          %433 = vst [vmem:[#allocation2 + $0x18] sm:$0xff] 0.0
          %434 = vst [vmem:[#allocation2 + $0x20] sm:$0xff] 0.0
          %435 = vst [vmem:[#allocation2 + $0x28] sm:$0xff] 0.0
          %436 = vst [vmem:[#allocation2 + $0x30] sm:$0xff] 0.0
          %437 = vst [vmem:[#allocation2 + $0x38] sm:$0xff] 0.0
          %438 = vst [vmem:[#allocation2 + $0x40] sm:$0xff] 0.0
          %439 = vst [vmem:[#allocation2 + $0x48] sm:$0xff] 0.0
          %440 = vst [vmem:[#allocation2 + $0x50] sm:$0xff] 0.0
          %441 = vst [vmem:[#allocation2 + $0x58] sm:$0xff] 0.0
          %442 = vst [vmem:[#allocation2 + $0x60] sm:$0xff] 0.0
          %443 = vst [vmem:[#allocation2 + $0x68] sm:$0xff] 0.0
          %444 = vst [vmem:[#allocation2 + $0x70] sm:$0xff] 0.0
          %445 = vst [vmem:[#allocation2 + $0x78] sm:$0xff] 0.0
        $region64: #{tpu_custom_call.1} parent=47 // pred_fallthru
          _
        %v446 = vld [vmem:[#allocation2] sm:$0xff]
        %v447 = vld [vmem:[#allocation2 + $0x8] sm:$0xff]
        %v448 = vld [vmem:[#allocation2 + $0x10] sm:$0xff]
        %v449 = vld [vmem:[#allocation2 + $0x18] sm:$0xff]
        %v450 = vld [vmem:[#allocation2 + $0x20] sm:$0xff]
        %v451 = vld [vmem:[#allocation2 + $0x28] sm:$0xff]
        %v452 = vld [vmem:[#allocation2 + $0x30] sm:$0xff]
        %v453 = vld [vmem:[#allocation2 + $0x38] sm:$0xff]
        %v454 = vld [vmem:[#allocation2 + $0x40] sm:$0xff]
        %v455 = vld [vmem:[#allocation2 + $0x48] sm:$0xff]
        %v456 = vld [vmem:[#allocation2 + $0x50] sm:$0xff]
        %v457 = vld [vmem:[#allocation2 + $0x58] sm:$0xff]
        %v458 = vld [vmem:[#allocation2 + $0x60] sm:$0xff]
        %v459 = vld [vmem:[#allocation2 + $0x68] sm:$0xff]
        %v460 = vld [vmem:[#allocation2 + $0x70] sm:$0xff]
        %v461 = vld [vmem:[#allocation2 + $0x78] sm:$0xff]
        %v462 = vld [vmem:[%s408] sm:$0xff]
        %v463 = vld [vmem:[%s408 + $0x8] sm:$0xff]
        %v464 = vld [vmem:[%s408 + $0x10] sm:$0xff]
        %v465 = vld [vmem:[%s408 + $0x18] sm:$0xff]
        %v466 = vld [vmem:[%s408 + $0x20] sm:$0xff]
        %v467 = vld [vmem:[%s408 + $0x28] sm:$0xff]
        %v468 = vld [vmem:[%s408 + $0x30] sm:$0xff]
        %v469 = vld [vmem:[%s408 + $0x38] sm:$0xff]
        %v470 = vunpack.c.l.s8.bf16 %v462
        %v471 = vunpack.c.l.s8.bf16 %v463
        %v472 = vunpack.c.h.s8.bf16 %v462
        %v473 = vunpack.c.h.s8.bf16 %v463
        %v474 = vunpack.c.l.s8.bf16 %v464
        %v475 = vunpack.c.l.s8.bf16 %v465
        %v476 = vunpack.c.h.s8.bf16 %v464
        %v477 = vunpack.c.h.s8.bf16 %v465
        %v478 = vunpack.c.l.s8.bf16 %v466
        %v479 = vunpack.c.l.s8.bf16 %v467
        %v480 = vunpack.c.h.s8.bf16 %v466
        %v481 = vunpack.c.h.s8.bf16 %v467
        %v482 = vunpack.c.l.s8.bf16 %v468
        %v483 = vunpack.c.l.s8.bf16 %v469
        %v484 = vunpack.c.h.s8.bf16 %v468
        %v485 = vunpack.c.h.s8.bf16 %v469
        %v486 = vld [vmem:[%s421] sm:$0xf]
        %v487 = vld [vmem:[%s421 + $0x4] sm:$0xf]
        %v488 = vld [vmem:[%s421 + $0x8] sm:$0xf]
        %v489 = vld [vmem:[%s421 + $0xc] sm:$0xf]
        %v490 = vld [vmem:[%s421 + $0x10] sm:$0xf]
        %v491 = vld [vmem:[%s421 + $0x14] sm:$0xf]
        %v492 = vld [vmem:[%s421 + $0x18] sm:$0xf]
        %v493 = vld [vmem:[%s421 + $0x1c] sm:$0xf]
        %v494 = vld [vmem:[%s421 + $0x20] sm:$0xf]
        %v495 = vld [vmem:[%s421 + $0x24] sm:$0xf]
        %v496 = vld [vmem:[%s421 + $0x28] sm:$0xf]
        %v497 = vld [vmem:[%s421 + $0x2c] sm:$0xf]
        %v498 = vld [vmem:[%s421 + $0x30] sm:$0xf]
        %v499 = vld [vmem:[%s421 + $0x34] sm:$0xf]
        %v500 = vld [vmem:[%s421 + $0x38] sm:$0xf]
        %v501 = vld [vmem:[%s421 + $0x3c] sm:$0xf]
        %v502 = vld [vmem:[%s421 + $0x40] sm:$0xf]
        %v503 = vld [vmem:[%s421 + $0x44] sm:$0xf]
        %v504 = vld [vmem:[%s421 + $0x48] sm:$0xf]
        %v505 = vld [vmem:[%s421 + $0x4c] sm:$0xf]
        %v506 = vld [vmem:[%s421 + $0x50] sm:$0xf]
        %v507 = vld [vmem:[%s421 + $0x54] sm:$0xf]
        %v508 = vld [vmem:[%s421 + $0x58] sm:$0xf]
        %v509 = vld [vmem:[%s421 + $0x5c] sm:$0xf]
        %v510 = vld [vmem:[%s421 + $0x60] sm:$0xf]
        %v511 = vld [vmem:[%s421 + $0x64] sm:$0xf]
        %v512 = vld [vmem:[%s421 + $0x68] sm:$0xf]
        %v513 = vld [vmem:[%s421 + $0x6c] sm:$0xf]
        %v514 = vld [vmem:[%s421 + $0x70] sm:$0xf]
        %v515 = vld [vmem:[%s421 + $0x74] sm:$0xf]
        %v516 = vld [vmem:[%s421 + $0x78] sm:$0xf]
        %v517 = vld [vmem:[%s421 + $0x7c] sm:$0xf]
        %v550 = vunpack.c.l.b16 %v486
        %v551 = vunpack.c.l.b16 %v487
        %v552 = vunpack.c.l.b16 %v488
        %v553 = vunpack.c.l.b16 %v489
        %v554 = vunpack.c.l.b16 %v490
        %v555 = vunpack.c.l.b16 %v491
        %v556 = vunpack.c.l.b16 %v492
        %v557 = vunpack.c.l.b16 %v493
        %v558 = vunpack.c.l.b16 %v494
        %v559 = vunpack.c.l.b16 %v495
        %v560 = vunpack.c.l.b16 %v496
        %v561 = vunpack.c.l.b16 %v497
        %v562 = vunpack.c.l.b16 %v498
        %v563 = vunpack.c.l.b16 %v499
        %v564 = vunpack.c.l.b16 %v500
        %v565 = vunpack.c.l.b16 %v501
        %v566 = vunpack.c.l.b16 %v502
        %v567 = vunpack.c.l.b16 %v503
        %v568 = vunpack.c.l.b16 %v504
        %v569 = vunpack.c.l.b16 %v505
        %v570 = vunpack.c.l.b16 %v506
        %v571 = vunpack.c.l.b16 %v507
        %v572 = vunpack.c.l.b16 %v508
        %v573 = vunpack.c.l.b16 %v509
        %v574 = vunpack.c.l.b16 %v510
        %v575 = vunpack.c.l.b16 %v511
        %v576 = vunpack.c.l.b16 %v512
        %v577 = vunpack.c.l.b16 %v513
        %v578 = vunpack.c.l.b16 %v514
        %v579 = vunpack.c.l.b16 %v515
        %v580 = vunpack.c.l.b16 %v516
        %v581 = vunpack.c.l.b16 %v517
        %v582 = vpack.c.b16 %v551, %v550
        %v583 = vpack.c.b16 %v553, %v552
        %v584 = vpack.c.b16 %v555, %v554
        %v585 = vpack.c.b16 %v557, %v556
        %v586 = vpack.c.b16 %v559, %v558
        %v587 = vpack.c.b16 %v561, %v560
        %v588 = vpack.c.b16 %v563, %v562
        %v589 = vpack.c.b16 %v565, %v564
        %v590 = vpack.c.b16 %v567, %v566
        %v591 = vpack.c.b16 %v569, %v568
        %v592 = vpack.c.b16 %v571, %v570
        %v593 = vpack.c.b16 %v573, %v572
        %v594 = vpack.c.b16 %v575, %v574
        %v595 = vpack.c.b16 %v577, %v576
        %v596 = vpack.c.b16 %v579, %v578
        %v597 = vpack.c.b16 %v581, %v580
        %614 = vmatprep.subr.bf16.mxu0 0
        %615 = vmatpush1.bf16.msra.mxu0 %v582
        %616 = vmatprep.subr.bf16.mxu0 0
        %617 = vmatpush1.bf16.msra.mxu0 %v583
        %618 = vmatprep.subr.bf16.mxu0 0
        %619 = vmatpush1.bf16.msra.mxu0 %v584
        %620 = vmatprep.subr.bf16.mxu0 0
        %621 = vmatpush1.bf16.msra.mxu0 %v585
        %622 = vmatprep.subr.bf16.mxu0 0
        %623 = vmatpush1.bf16.msra.mxu0 %v586
        %624 = vmatprep.subr.bf16.mxu0 0
        %625 = vmatpush1.bf16.msra.mxu0 %v587
        %626 = vmatprep.subr.bf16.mxu0 0
        %627 = vmatpush1.bf16.msra.mxu0 %v588
        %628 = vmatprep.subr.bf16.mxu0 0
        %629 = vmatpush1.bf16.msra.mxu0 %v589
        %630 = vmatprep.subr.bf16.mxu0 0
        %631 = vmatpush1.bf16.msra.mxu0 %v590
        %632 = vmatprep.subr.bf16.mxu0 0
        %633 = vmatpush1.bf16.msra.mxu0 %v591
        %634 = vmatprep.subr.bf16.mxu0 0
        %635 = vmatpush1.bf16.msra.mxu0 %v592
        %636 = vmatprep.subr.bf16.mxu0 0
        %637 = vmatpush1.bf16.msra.mxu0 %v593
        %638 = vmatprep.subr.bf16.mxu0 0
        %639 = vmatpush1.bf16.msra.mxu0 %v594
        %640 = vmatprep.subr.bf16.mxu0 0
        %641 = vmatpush1.bf16.msra.mxu0 %v595
        %642 = vmatprep.subr.bf16.mxu0 0
        %643 = vmatpush1.bf16.msra.mxu0 %v596
        %644 = vmatprep.subr.bf16.mxu0 0
        %645 = vmatpush1.bf16.msra.mxu0 %v597
        %646 = vmatprep.mubr.bf16.mxu0 %v471
        %647 = vmatmul.mubr.bf16.gmra.mrb[0].mxu0 %v470
        %v648 = vpop.f32.mrb[0].mxu0
        %v649 = vadd.f32 0.0, %v648
        %v650 = vpop.f32.mrb[0].mxu0
        %v651 = vpop.f32.mrb[0].mxu0
        %v652 = vadd.f32 0.0, %v651
        %v653 = vpop.f32.mrb[0].mxu0
        %654 = vmatprep.mubr.bf16.mxu0 %v473
        %655 = vmatmul.mubr.bf16.gmra.mrb[0].mxu0 %v472
        %v656 = vpop.f32.mrb[0].mxu0
        %v657 = vadd.f32 0.0, %v656
        %v658 = vpop.f32.mrb[0].mxu0
        %v659 = vpop.f32.mrb[0].mxu0
        %v660 = vadd.f32 0.0, %v659
        %v661 = vpop.f32.mrb[0].mxu0
        %662 = vmatprep.mubr.bf16.mxu0 %v475
        %663 = vmatmul.mubr.bf16.gmra.mrb[0].mxu0 %v474
        %v664 = vpop.f32.mrb[0].mxu0
        %v665 = vadd.f32 0.0, %v664
        %v666 = vpop.f32.mrb[0].mxu0
        %v667 = vpop.f32.mrb[0].mxu0
        %v668 = vadd.f32 0.0, %v667
        %v669 = vpop.f32.mrb[0].mxu0
        %670 = vmatprep.mubr.bf16.mxu0 %v477
        %671 = vmatmul.mubr.bf16.gmra.mrb[0].mxu0 %v476
        %v672 = vpop.f32.mrb[0].mxu0
        %v673 = vadd.f32 0.0, %v672
        %v674 = vpop.f32.mrb[0].mxu0
        %v675 = vpop.f32.mrb[0].mxu0
        %v676 = vadd.f32 0.0, %v675
        %v677 = vpop.f32.mrb[0].mxu0
        %678 = vmatprep.mubr.bf16.mxu0 %v479
        %679 = vmatmul.mubr.bf16.gmra.mrb[0].mxu0 %v478
        %v680 = vpop.f32.mrb[0].mxu0
        %v681 = vadd.f32 0.0, %v680
        %v682 = vpop.f32.mrb[0].mxu0
        %v683 = vpop.f32.mrb[0].mxu0
        %v684 = vadd.f32 0.0, %v683
        %v685 = vpop.f32.mrb[0].mxu0
        %686 = vmatprep.mubr.bf16.mxu0 %v481
        %687 = vmatmul.mubr.bf16.gmra.mrb[0].mxu0 %v480
        %v688 = vpop.f32.mrb[0].mxu0
        %v689 = vadd.f32 0.0, %v688
        %v690 = vpop.f32.mrb[0].mxu0
        %v691 = vpop.f32.mrb[0].mxu0
        %v692 = vadd.f32 0.0, %v691
        %v693 = vpop.f32.mrb[0].mxu0
        %694 = vmatprep.mubr.bf16.mxu0 %v483
        %695 = vmatmul.mubr.bf16.gmra.mrb[0].mxu0 %v482
        %v696 = vpop.f32.mrb[0].mxu0
        %v697 = vadd.f32 0.0, %v696
        %v698 = vpop.f32.mrb[0].mxu0
        %v699 = vpop.f32.mrb[0].mxu0
        %v700 = vadd.f32 0.0, %v699
        %v701 = vpop.f32.mrb[0].mxu0
        %702 = vmatprep.mubr.bf16.mxu0 %v485
        %703 = vmatmul.mubr.bf16.gmra.mrb[0].mxu0 %v484
        %v704 = vpop.f32.mrb[0].mxu0
        %v705 = vadd.f32 0.0, %v704
        %v706 = vpop.f32.mrb[0].mxu0
        %v707 = vpop.f32.mrb[0].mxu0
        %v708 = vadd.f32 0.0, %v707
        %v709 = vpop.f32.mrb[0].mxu0
        %710 = vdwg.mxu0
        %v711 = vadd.f32 %v446, %v649
        %v712 = vadd.f32 %v447, %v652
        %v713 = vadd.f32 %v448, %v657
        %v714 = vadd.f32 %v449, %v660
        %v715 = vadd.f32 %v450, %v665
        %v716 = vadd.f32 %v451, %v668
        %v717 = vadd.f32 %v452, %v673
        %v718 = vadd.f32 %v453, %v676
        %v719 = vadd.f32 %v454, %v681
        %v720 = vadd.f32 %v455, %v684
        %v721 = vadd.f32 %v456, %v689
        %v722 = vadd.f32 %v457, %v692
        %v723 = vadd.f32 %v458, %v697
        %v724 = vadd.f32 %v459, %v700
        %v725 = vadd.f32 %v460, %v705
        %v726 = vadd.f32 %v461, %v708
        %727 = vst [vmem:[#allocation2] sm:$0xff] %v711
        %728 = vst [vmem:[#allocation2 + $0x8] sm:$0xff] %v712
        %729 = vst [vmem:[#allocation2 + $0x10] sm:$0xff] %v713
        %730 = vst [vmem:[#allocation2 + $0x18] sm:$0xff] %v714
        %731 = vst [vmem:[#allocation2 + $0x20] sm:$0xff] %v715
        %732 = vst [vmem:[#allocation2 + $0x28] sm:$0xff] %v716
        %733 = vst [vmem:[#allocation2 + $0x30] sm:$0xff] %v717
        %734 = vst [vmem:[#allocation2 + $0x38] sm:$0xff] %v718
        %735 = vst [vmem:[#allocation2 + $0x40] sm:$0xff] %v719
        %736 = vst [vmem:[#allocation2 + $0x48] sm:$0xff] %v720
        %737 = vst [vmem:[#allocation2 + $0x50] sm:$0xff] %v721
        %738 = vst [vmem:[#allocation2 + $0x58] sm:$0xff] %v722
        %739 = vst [vmem:[#allocation2 + $0x60] sm:$0xff] %v723
        %740 = vst [vmem:[#allocation2 + $0x68] sm:$0xff] %v724
        %741 = vst [vmem:[#allocation2 + $0x70] sm:$0xff] %v725
        %742 = vst [vmem:[#allocation2 + $0x78] sm:$0xff] %v726
        // Predicated region
        $region65: #{tpu_custom_call.1} parent=47 // pred_check
          %p743 = pneg %p426
        $region66: #{tpu_custom_call.1} parent=47 // pred_check_branch
          %745 = sbr.rel (%p743) target = $region68
        $region67: #{tpu_custom_call.1} parent=47 // pred_region
          %v746 = vld [vmem:[#allocation2] sm:$0xff]
          %v747 = vld [vmem:[#allocation2 + $0x8] sm:$0xff]
          %v748 = vld [vmem:[#allocation2 + $0x10] sm:$0xff]
          %v749 = vld [vmem:[#allocation2 + $0x18] sm:$0xff]
          %v750 = vld [vmem:[#allocation2 + $0x20] sm:$0xff]
          %v751 = vld [vmem:[#allocation2 + $0x28] sm:$0xff]
          %v752 = vld [vmem:[#allocation2 + $0x30] sm:$0xff]
          %v753 = vld [vmem:[#allocation2 + $0x38] sm:$0xff]
          %v754 = vld [vmem:[#allocation2 + $0x40] sm:$0xff]
          %v755 = vld [vmem:[#allocation2 + $0x48] sm:$0xff]
          %v756 = vld [vmem:[#allocation2 + $0x50] sm:$0xff]
          %v757 = vld [vmem:[#allocation2 + $0x58] sm:$0xff]
          %v758 = vld [vmem:[#allocation2 + $0x60] sm:$0xff]
          %v759 = vld [vmem:[#allocation2 + $0x68] sm:$0xff]
          %v760 = vld [vmem:[#allocation2 + $0x70] sm:$0xff]
          %v761 = vld [vmem:[#allocation2 + $0x78] sm:$0xff]
          %v762 = vld [vmem:[%s415] sm:$0xff]
          %v763 = vld [vmem:[%s415 + $0x8] sm:$0xff]
          %v764 = vld [vmem:[%s415 + $0x10] sm:$0xff]
          %v765 = vld [vmem:[%s415 + $0x18] sm:$0xff]
          %v766 = vld [vmem:[%s415 + $0x20] sm:$0xff]
          %v767 = vld [vmem:[%s415 + $0x28] sm:$0xff]
          %v768 = vld [vmem:[%s415 + $0x30] sm:$0xff]
          %v769 = vld [vmem:[%s415 + $0x38] sm:$0xff]
          %v770 = vld [vmem:[%s415 + $0x40] sm:$0xff]
          %v771 = vld [vmem:[%s415 + $0x48] sm:$0xff]
          %v772 = vld [vmem:[%s415 + $0x50] sm:$0xff]
          %v773 = vld [vmem:[%s415 + $0x58] sm:$0xff]
          %v774 = vld [vmem:[%s415 + $0x60] sm:$0xff]
          %v775 = vld [vmem:[%s415 + $0x68] sm:$0xff]
          %v776 = vld [vmem:[%s415 + $0x70] sm:$0xff]
          %v777 = vld [vmem:[%s415 + $0x78] sm:$0xff]
          %779 = vset.pattern.permute.xlu0 0
          %780 = vperm.xlu0 %779, %v762
          %v781 = vpop.permute.xlu0 %780
          %784 = vset.pattern.permute.xlu0 0
          %785 = vperm.xlu0 %784, %v763
          %v786 = vpop.permute.xlu0 %785
          %789 = vset.pattern.permute.xlu0 0
          %790 = vperm.xlu0 %789, %v764
          %v791 = vpop.permute.xlu0 %790
          %794 = vset.pattern.permute.xlu0 0
          %795 = vperm.xlu0 %794, %v765
          %v796 = vpop.permute.xlu0 %795
          %799 = vset.pattern.permute.xlu0 0
          %800 = vperm.xlu0 %799, %v766
          %v801 = vpop.permute.xlu0 %800
          %804 = vset.pattern.permute.xlu0 0
          %805 = vperm.xlu0 %804, %v767
          %v806 = vpop.permute.xlu0 %805
          %809 = vset.pattern.permute.xlu0 0
          %810 = vperm.xlu0 %809, %v768
          %v811 = vpop.permute.xlu0 %810
          %814 = vset.pattern.permute.xlu0 0
          %815 = vperm.xlu0 %814, %v769
          %v816 = vpop.permute.xlu0 %815
          %819 = vset.pattern.permute.xlu0 0
          %820 = vperm.xlu0 %819, %v770
          %v821 = vpop.permute.xlu0 %820
          %824 = vset.pattern.permute.xlu0 0
          %825 = vperm.xlu0 %824, %v771
          %v826 = vpop.permute.xlu0 %825
          %829 = vset.pattern.permute.xlu0 0
          %830 = vperm.xlu0 %829, %v772
          %v831 = vpop.permute.xlu0 %830
          %834 = vset.pattern.permute.xlu0 0
          %835 = vperm.xlu0 %834, %v773
          %v836 = vpop.permute.xlu0 %835
          %839 = vset.pattern.permute.xlu0 0
          %840 = vperm.xlu0 %839, %v774
          %v841 = vpop.permute.xlu0 %840
          %844 = vset.pattern.permute.xlu0 0
          %845 = vperm.xlu0 %844, %v775
          %v846 = vpop.permute.xlu0 %845
          %849 = vset.pattern.permute.xlu0 0
          %850 = vperm.xlu0 %849, %v776
          %v851 = vpop.permute.xlu0 %850
          %854 = vset.pattern.permute.xlu0 0
          %855 = vperm.xlu0 %854, %v777
          %v856 = vpop.permute.xlu0 %855
          %v858 = vmul.f32 %v746, %v781
          %v859 = vmul.f32 %v747, %v786
          %v860 = vmul.f32 %v748, %v791
          %v861 = vmul.f32 %v749, %v796
          %v862 = vmul.f32 %v750, %v801
          %v863 = vmul.f32 %v751, %v806
          %v864 = vmul.f32 %v752, %v811
          %v865 = vmul.f32 %v753, %v816
          %v866 = vmul.f32 %v754, %v821
          %v867 = vmul.f32 %v755, %v826
          %v868 = vmul.f32 %v756, %v831
          %v869 = vmul.f32 %v757, %v836
          %v870 = vmul.f32 %v758, %v841
          %v871 = vmul.f32 %v759, %v846
          %v872 = vmul.f32 %v760, %v851
          %v873 = vmul.f32 %v761, %v856
          %v874 = vpack.c.bf16 %v859, %v858
          %v875 = vpack.c.bf16 %v861, %v860
          %v876 = vpack.c.bf16 %v863, %v862
          %v877 = vpack.c.bf16 %v865, %v864
          %v878 = vpack.c.bf16 %v867, %v866
          %v879 = vpack.c.bf16 %v869, %v868
          %v880 = vpack.c.bf16 %v871, %v870
          %v881 = vpack.c.bf16 %v873, %v872
          %v882 = vld [vmem:[#allocation6] sm:$0xf]
          %v883 = vld [vmem:[#allocation6 + $0x4] sm:$0xf]
          %v884 = vld [vmem:[#allocation6 + $0x8] sm:$0xf]
          %v885 = vld [vmem:[#allocation6 + $0xc] sm:$0xf]
          %v886 = vld [vmem:[#allocation6 + $0x10] sm:$0xf]
          %v887 = vld [vmem:[#allocation6 + $0x14] sm:$0xf]
          %v888 = vld [vmem:[#allocation6 + $0x18] sm:$0xf]
          %v889 = vld [vmem:[#allocation6 + $0x1c] sm:$0xf]
          %v890 = vld [vmem:[#allocation6 + $0x20] sm:$0xf]
          %v891 = vld [vmem:[#allocation6 + $0x24] sm:$0xf]
          %v892 = vld [vmem:[#allocation6 + $0x28] sm:$0xf]
          %v893 = vld [vmem:[#allocation6 + $0x2c] sm:$0xf]
          %v894 = vld [vmem:[#allocation6 + $0x30] sm:$0xf]
          %v895 = vld [vmem:[#allocation6 + $0x34] sm:$0xf]
          %v896 = vld [vmem:[#allocation6 + $0x38] sm:$0xf]
          %v897 = vld [vmem:[#allocation6 + $0x3c] sm:$0xf]
          %v898 = vld [vmem:[%s340] sm:$0xf]
          %v899 = vld [vmem:[%s340 + $0x4] sm:$0xf]
          %v900 = vld [vmem:[%s340 + $0x8] sm:$0xf]
          %v901 = vld [vmem:[%s340 + $0xc] sm:$0xf]
          %v902 = vld [vmem:[%s340 + $0x10] sm:$0xf]
          %v903 = vld [vmem:[%s340 + $0x14] sm:$0xf]
          %v904 = vld [vmem:[%s340 + $0x18] sm:$0xf]
          %v905 = vld [vmem:[%s340 + $0x1c] sm:$0xf]
          %v906 = vld [vmem:[%s340 + $0x20] sm:$0xf]
          %v907 = vld [vmem:[%s340 + $0x24] sm:$0xf]
          %v908 = vld [vmem:[%s340 + $0x28] sm:$0xf]
          %v909 = vld [vmem:[%s340 + $0x2c] sm:$0xf]
          %v910 = vld [vmem:[%s340 + $0x30] sm:$0xf]
          %v911 = vld [vmem:[%s340 + $0x34] sm:$0xf]
          %v912 = vld [vmem:[%s340 + $0x38] sm:$0xf]
          %v913 = vld [vmem:[%s340 + $0x3c] sm:$0xf]
          %v914 = vld [vmem:[#allocation8] sm:$0xf]
          %v915 = vld [vmem:[#allocation8 + $0x4] sm:$0xf]
          %v916 = vld [vmem:[#allocation8 + $0x8] sm:$0xf]
          %v917 = vld [vmem:[#allocation8 + $0xc] sm:$0xf]
          %v918 = vld [vmem:[#allocation8 + $0x10] sm:$0xf]
          %v919 = vld [vmem:[#allocation8 + $0x14] sm:$0xf]
          %v920 = vld [vmem:[#allocation8 + $0x18] sm:$0xf]
          %v921 = vld [vmem:[#allocation8 + $0x1c] sm:$0xf]
          %v922 = vld [vmem:[#allocation8 + $0x20] sm:$0xf]
          %v923 = vld [vmem:[#allocation8 + $0x24] sm:$0xf]
          %v924 = vld [vmem:[#allocation8 + $0x28] sm:$0xf]
          %v925 = vld [vmem:[#allocation8 + $0x2c] sm:$0xf]
          %v926 = vld [vmem:[#allocation8 + $0x30] sm:$0xf]
          %v927 = vld [vmem:[#allocation8 + $0x34] sm:$0xf]
          %v928 = vld [vmem:[#allocation8 + $0x38] sm:$0xf]
          %v929 = vld [vmem:[#allocation8 + $0x3c] sm:$0xf]
          %v946 = vunpack.c.l.b16 %v898
          %v947 = vunpack.c.l.b16 %v899
          %v948 = vunpack.c.l.b16 %v900
          %v949 = vunpack.c.l.b16 %v901
          %v950 = vunpack.c.l.b16 %v902
          %v951 = vunpack.c.l.b16 %v903
          %v952 = vunpack.c.l.b16 %v904
          %v953 = vunpack.c.l.b16 %v905
          %v954 = vunpack.c.l.b16 %v906
          %v955 = vunpack.c.l.b16 %v907
          %v956 = vunpack.c.l.b16 %v908
          %v957 = vunpack.c.l.b16 %v909
          %v958 = vunpack.c.l.b16 %v910
          %v959 = vunpack.c.l.b16 %v911
          %v960 = vunpack.c.l.b16 %v912
          %v961 = vunpack.c.l.b16 %v913
          %v962 = vpack.c.b16 %v947, %v946
          %v963 = vpack.c.b16 %v949, %v948
          %v964 = vpack.c.b16 %v951, %v950
          %v965 = vpack.c.b16 %v953, %v952
          %v966 = vpack.c.b16 %v955, %v954
          %v967 = vpack.c.b16 %v957, %v956
          %v968 = vpack.c.b16 %v959, %v958
          %v969 = vpack.c.b16 %v961, %v960
          %v994 = vunpack.c.l.b16 %v914
          %v995 = vunpack.c.l.b16 %v915
          %v996 = vunpack.c.l.b16 %v916
          %v997 = vunpack.c.l.b16 %v917
          %v998 = vunpack.c.l.b16 %v918
          %v999 = vunpack.c.l.b16 %v919
          %v1000 = vunpack.c.l.b16 %v920
          %v1001 = vunpack.c.l.b16 %v921
          %v1002 = vunpack.c.l.b16 %v922
          %v1003 = vunpack.c.l.b16 %v923
          %v1004 = vunpack.c.l.b16 %v924
          %v1005 = vunpack.c.l.b16 %v925
          %v1006 = vunpack.c.l.b16 %v926
          %v1007 = vunpack.c.l.b16 %v927
          %v1008 = vunpack.c.l.b16 %v928
          %v1009 = vunpack.c.l.b16 %v929
          %v1010 = vpack.c.b16 %v995, %v994
          %v1011 = vpack.c.b16 %v997, %v996
          %v1012 = vpack.c.b16 %v999, %v998
          %v1013 = vpack.c.b16 %v1001, %v1000
          %v1014 = vpack.c.b16 %v1003, %v1002
          %v1015 = vpack.c.b16 %v1005, %v1004
          %v1016 = vpack.c.b16 %v1007, %v1006
          %v1017 = vpack.c.b16 %v1009, %v1008
          %1026 = vmatprep.subr.bf16.mxu0 0
          %1027 = vmatpush1.bf16.msra.mxu0 %v1010
          %1028 = vmatprep.subr.bf16.mxu0 0
          %1029 = vmatpush1.bf16.msra.mxu0 %v1011
          %1030 = vmatprep.subr.bf16.mxu0 0
          %1031 = vmatpush1.bf16.msra.mxu0 %v1012
          %1032 = vmatprep.subr.bf16.mxu0 0
          %1033 = vmatpush1.bf16.msra.mxu0 %v1013
          %1034 = vmatprep.subr.bf16.mxu0 0
          %1035 = vmatpush1.bf16.msra.mxu0 %v1014
          %1036 = vmatprep.subr.bf16.mxu0 0
          %1037 = vmatpush1.bf16.msra.mxu0 %v1015
          %1038 = vmatprep.subr.bf16.mxu0 0
          %1039 = vmatpush1.bf16.msra.mxu0 %v1016
          %1040 = vmatprep.subr.bf16.mxu0 0
          %1041 = vmatpush1.bf16.msra.mxu0 %v1017
          %1042 = vmatprep.subr.bf16.mxu0 0
          %1043 = vmatpush1.bf16.msra.mxu0 0
          %1044 = vmatprep.subr.bf16.mxu0 0
          %1045 = vmatpush1.bf16.msra.mxu0 0
          %1046 = vmatprep.subr.bf16.mxu0 0
          %1047 = vmatpush1.bf16.msra.mxu0 0
          %1048 = vmatprep.subr.bf16.mxu0 0
          %1049 = vmatpush1.bf16.msra.mxu0 0
          %1050 = vmatprep.subr.bf16.mxu0 0
          %1051 = vmatpush1.bf16.msra.mxu0 0
          %1052 = vmatprep.subr.bf16.mxu0 0
          %1053 = vmatpush1.bf16.msra.mxu0 0
          %1054 = vmatprep.subr.bf16.mxu0 0
          %1055 = vmatpush1.bf16.msra.mxu0 0
          %1056 = vmatprep.subr.bf16.mxu0 0
          %1057 = vmatpush1.bf16.msra.mxu0 0
          %1058 = vmatprep.mubr.bf16.mxu0 0
          %1059 = vmatmul.mubr.bf16.gmra.mrb[0].mxu0 %v962
          %v1060 = vpop.f32.mrb[0].mxu0
          %v1061 = vadd.f32 0.0, %v1060
          %v1062 = vpop.f32.mrb[0].mxu0
          %v1063 = vpop.f32.mrb[0].mxu0
          %v1064 = vadd.f32 0.0, %v1063
          %v1065 = vpop.f32.mrb[0].mxu0
          %1066 = vmatprep.mubr.bf16.mxu0 0
          %1067 = vmatmul.mubr.bf16.gmra.mrb[0].mxu0 %v963
          %v1068 = vpop.f32.mrb[0].mxu0
          %v1069 = vadd.f32 0.0, %v1068
          %v1070 = vpop.f32.mrb[0].mxu0
          %v1071 = vpop.f32.mrb[0].mxu0
          %v1072 = vadd.f32 0.0, %v1071
          %v1073 = vpop.f32.mrb[0].mxu0
          %1074 = vmatprep.mubr.bf16.mxu0 0
          %1075 = vmatmul.mubr.bf16.gmra.mrb[0].mxu0 %v964
          %v1076 = vpop.f32.mrb[0].mxu0
          %v1077 = vadd.f32 0.0, %v1076
          %v1078 = vpop.f32.mrb[0].mxu0
          %v1079 = vpop.f32.mrb[0].mxu0
          %v1080 = vadd.f32 0.0, %v1079
          %v1081 = vpop.f32.mrb[0].mxu0
          %1082 = vmatprep.mubr.bf16.mxu0 0
          %1083 = vmatmul.mubr.bf16.gmra.mrb[0].mxu0 %v965
          %v1084 = vpop.f32.mrb[0].mxu0
          %v1085 = vadd.f32 0.0, %v1084
          %v1086 = vpop.f32.mrb[0].mxu0
          %v1087 = vpop.f32.mrb[0].mxu0
          %v1088 = vadd.f32 0.0, %v1087
          %v1089 = vpop.f32.mrb[0].mxu0
          %1090 = vmatprep.mubr.bf16.mxu0 0
          %1091 = vmatmul.mubr.bf16.gmra.mrb[0].mxu0 %v966
          %v1092 = vpop.f32.mrb[0].mxu0
          %v1093 = vadd.f32 0.0, %v1092
          %v1094 = vpop.f32.mrb[0].mxu0
          %v1095 = vpop.f32.mrb[0].mxu0
          %v1096 = vadd.f32 0.0, %v1095
          %v1097 = vpop.f32.mrb[0].mxu0
          %1098 = vmatprep.mubr.bf16.mxu0 0
          %1099 = vmatmul.mubr.bf16.gmra.mrb[0].mxu0 %v967
          %v1100 = vpop.f32.mrb[0].mxu0
          %v1101 = vadd.f32 0.0, %v1100
          %v1102 = vpop.f32.mrb[0].mxu0
          %v1103 = vpop.f32.mrb[0].mxu0
          %v1104 = vadd.f32 0.0, %v1103
          %v1105 = vpop.f32.mrb[0].mxu0
          %1106 = vmatprep.mubr.bf16.mxu0 0
          %1107 = vmatmul.mubr.bf16.gmra.mrb[0].mxu0 %v968
          %v1108 = vpop.f32.mrb[0].mxu0
          %v1109 = vadd.f32 0.0, %v1108
          %v1110 = vpop.f32.mrb[0].mxu0
          %v1111 = vpop.f32.mrb[0].mxu0
          %v1112 = vadd.f32 0.0, %v1111
          %v1113 = vpop.f32.mrb[0].mxu0
          %1114 = vmatprep.mubr.bf16.mxu0 0
          %1115 = vmatmul.mubr.bf16.gmra.mrb[0].mxu0 %v969
          %v1116 = vpop.f32.mrb[0].mxu0
          %v1117 = vadd.f32 0.0, %v1116
          %v1118 = vpop.f32.mrb[0].mxu0
          %v1119 = vpop.f32.mrb[0].mxu0
          %v1120 = vadd.f32 0.0, %v1119
          %v1121 = vpop.f32.mrb[0].mxu0
          %1122 = vdwg.mxu0
          %v1139 = vunpack.c.l.b16 %v882
          %v1140 = vunpack.c.l.b16 %v883
          %v1141 = vunpack.c.l.b16 %v884
          %v1142 = vunpack.c.l.b16 %v885
          %v1143 = vunpack.c.l.b16 %v886
          %v1144 = vunpack.c.l.b16 %v887
          %v1145 = vunpack.c.l.b16 %v888
          %v1146 = vunpack.c.l.b16 %v889
          %v1147 = vunpack.c.l.b16 %v890
          %v1148 = vunpack.c.l.b16 %v891
          %v1149 = vunpack.c.l.b16 %v892
          %v1150 = vunpack.c.l.b16 %v893
          %v1151 = vunpack.c.l.b16 %v894
          %v1152 = vunpack.c.l.b16 %v895
          %v1153 = vunpack.c.l.b16 %v896
          %v1154 = vunpack.c.l.b16 %v897
          %v1155 = vpack.c.b16 %v1140, %v1139
          %v1156 = vpack.c.b16 %v1142, %v1141
          %v1157 = vpack.c.b16 %v1144, %v1143
          %v1158 = vpack.c.b16 %v1146, %v1145
          %v1159 = vpack.c.b16 %v1148, %v1147
          %v1160 = vpack.c.b16 %v1150, %v1149
          %v1161 = vpack.c.b16 %v1152, %v1151
          %v1162 = vpack.c.b16 %v1154, %v1153
          %1171 = vmatprep.subr.bf16.mxu0 0
          %1172 = vmatpush1.bf16.msra.mxu0 %v1155
          %1173 = vmatprep.subr.bf16.mxu0 0
          %1174 = vmatpush1.bf16.msra.mxu0 %v1156
          %1175 = vmatprep.subr.bf16.mxu0 0
          %1176 = vmatpush1.bf16.msra.mxu0 %v1157
          %1177 = vmatprep.subr.bf16.mxu0 0
          %1178 = vmatpush1.bf16.msra.mxu0 %v1158
          %1179 = vmatprep.subr.bf16.mxu0 0
          %1180 = vmatpush1.bf16.msra.mxu0 %v1159
          %1181 = vmatprep.subr.bf16.mxu0 0
          %1182 = vmatpush1.bf16.msra.mxu0 %v1160
          %1183 = vmatprep.subr.bf16.mxu0 0
          %1184 = vmatpush1.bf16.msra.mxu0 %v1161
          %1185 = vmatprep.subr.bf16.mxu0 0
          %1186 = vmatpush1.bf16.msra.mxu0 %v1162
          %1187 = vmatprep.subr.bf16.mxu0 0
          %1188 = vmatpush1.bf16.msra.mxu0 0
          %1189 = vmatprep.subr.bf16.mxu0 0
          %1190 = vmatpush1.bf16.msra.mxu0 0
          %1191 = vmatprep.subr.bf16.mxu0 0
          %1192 = vmatpush1.bf16.msra.mxu0 0
          %1193 = vmatprep.subr.bf16.mxu0 0
          %1194 = vmatpush1.bf16.msra.mxu0 0
          %1195 = vmatprep.subr.bf16.mxu0 0
          %1196 = vmatpush1.bf16.msra.mxu0 0
          %1197 = vmatprep.subr.bf16.mxu0 0
          %1198 = vmatpush1.bf16.msra.mxu0 0
          %1199 = vmatprep.subr.bf16.mxu0 0
          %1200 = vmatpush1.bf16.msra.mxu0 0
          %1201 = vmatprep.subr.bf16.mxu0 0
          %1202 = vmatpush1.bf16.msra.mxu0 0
          %1203 = vmatprep.mubr.bf16.mxu0 0
          %1204 = vmatmul.mubr.bf16.gmra.mrb[0].mxu0 %v874
          %v1205 = vpop.f32.mrb[0].mxu0
          %v1206 = vadd.f32 %v1061, %v1205
          %v1207 = vpop.f32.mrb[0].mxu0
          %v1208 = vpop.f32.mrb[0].mxu0
          %v1209 = vadd.f32 %v1064, %v1208
          %v1210 = vpop.f32.mrb[0].mxu0
          %1211 = vmatprep.mubr.bf16.mxu0 0
          %1212 = vmatmul.mubr.bf16.gmra.mrb[0].mxu0 %v875
          %v1213 = vpop.f32.mrb[0].mxu0
          %v1214 = vadd.f32 %v1069, %v1213
          %v1215 = vpop.f32.mrb[0].mxu0
          %v1216 = vpop.f32.mrb[0].mxu0
          %v1217 = vadd.f32 %v1072, %v1216
          %v1218 = vpop.f32.mrb[0].mxu0
          %1219 = vmatprep.mubr.bf16.mxu0 0
          %1220 = vmatmul.mubr.bf16.gmra.mrb[0].mxu0 %v876
          %v1221 = vpop.f32.mrb[0].mxu0
          %v1222 = vadd.f32 %v1077, %v1221
          %v1223 = vpop.f32.mrb[0].mxu0
          %v1224 = vpop.f32.mrb[0].mxu0
          %v1225 = vadd.f32 %v1080, %v1224
          %v1226 = vpop.f32.mrb[0].mxu0
          %1227 = vmatprep.mubr.bf16.mxu0 0
          %1228 = vmatmul.mubr.bf16.gmra.mrb[0].mxu0 %v877
          %v1229 = vpop.f32.mrb[0].mxu0
          %v1230 = vadd.f32 %v1085, %v1229
          %v1231 = vpop.f32.mrb[0].mxu0
          %v1232 = vpop.f32.mrb[0].mxu0
          %v1233 = vadd.f32 %v1088, %v1232
          %v1234 = vpop.f32.mrb[0].mxu0
          %1235 = vmatprep.mubr.bf16.mxu0 0
          %1236 = vmatmul.mubr.bf16.gmra.mrb[0].mxu0 %v878
          %v1237 = vpop.f32.mrb[0].mxu0
          %v1238 = vadd.f32 %v1093, %v1237
          %v1239 = vpop.f32.mrb[0].mxu0
          %v1240 = vpop.f32.mrb[0].mxu0
          %v1241 = vadd.f32 %v1096, %v1240
          %v1242 = vpop.f32.mrb[0].mxu0
          %1243 = vmatprep.mubr.bf16.mxu0 0
          %1244 = vmatmul.mubr.bf16.gmra.mrb[0].mxu0 %v879
          %v1245 = vpop.f32.mrb[0].mxu0
          %v1246 = vadd.f32 %v1101, %v1245
          %v1247 = vpop.f32.mrb[0].mxu0
          %v1248 = vpop.f32.mrb[0].mxu0
          %v1249 = vadd.f32 %v1104, %v1248
          %v1250 = vpop.f32.mrb[0].mxu0
          %1251 = vmatprep.mubr.bf16.mxu0 0
          %1252 = vmatmul.mubr.bf16.gmra.mrb[0].mxu0 %v880
          %v1253 = vpop.f32.mrb[0].mxu0
          %v1254 = vadd.f32 %v1109, %v1253
          %v1255 = vpop.f32.mrb[0].mxu0
          %v1256 = vpop.f32.mrb[0].mxu0
          %v1257 = vadd.f32 %v1112, %v1256
          %v1258 = vpop.f32.mrb[0].mxu0
          %1259 = vmatprep.mubr.bf16.mxu0 0
          %1260 = vmatmul.mubr.bf16.gmra.mrb[0].mxu0 %v881
          %v1261 = vpop.f32.mrb[0].mxu0
          %v1262 = vadd.f32 %v1117, %v1261
          %v1263 = vpop.f32.mrb[0].mxu0
          %v1264 = vpop.f32.mrb[0].mxu0
          %v1265 = vadd.f32 %v1120, %v1264
          %v1266 = vpop.f32.mrb[0].mxu0
          %1267 = vdwg.mxu0
          %v1268 = vld [vmem:[%s6] sm:$0x1]
          %v1270 = vlaneseq
          %v1271 = vshrl.u32 %v1270, 7
          %v1272 = vsub.s32 0, %v1271
          %v1273 = vrot.slane %v1268, %v1272
          %v1275 = vadd.f32 %v1206, %v1273
          %v1276 = vadd.f32 %v1209, %v1273
          %v1277 = vadd.f32 %v1214, %v1273
          %v1278 = vadd.f32 %v1217, %v1273
          %v1279 = vadd.f32 %v1222, %v1273
          %v1280 = vadd.f32 %v1225, %v1273
          %v1281 = vadd.f32 %v1230, %v1273
          %v1282 = vadd.f32 %v1233, %v1273
          %v1283 = vadd.f32 %v1238, %v1273
          %v1284 = vadd.f32 %v1241, %v1273
          %v1285 = vadd.f32 %v1246, %v1273
          %v1286 = vadd.f32 %v1249, %v1273
          %v1287 = vadd.f32 %v1254, %v1273
          %v1288 = vadd.f32 %v1257, %v1273
          %v1289 = vadd.f32 %v1262, %v1273
          %v1290 = vadd.f32 %v1265, %v1273
          %v1291 = vmax.f32 %v1275, 0.0
          %v1292 = vmax.f32 %v1276, 0.0
          %v1293 = vmax.f32 %v1277, 0.0
          %v1294 = vmax.f32 %v1278, 0.0
          %v1295 = vmax.f32 %v1279, 0.0
          %v1296 = vmax.f32 %v1280, 0.0
          %v1297 = vmax.f32 %v1281, 0.0
          %v1298 = vmax.f32 %v1282, 0.0
          %v1299 = vmax.f32 %v1283, 0.0
          %v1300 = vmax.f32 %v1284, 0.0
          %v1301 = vmax.f32 %v1285, 0.0
          %v1302 = vmax.f32 %v1286, 0.0
          %v1303 = vmax.f32 %v1287, 0.0
          %v1304 = vmax.f32 %v1288, 0.0
          %v1305 = vmax.f32 %v1289, 0.0
          %v1306 = vmax.f32 %v1290, 0.0
          %v1307 = vpack.c.bf16 %v1292, %v1291
          %v1308 = vpack.c.bf16 %v1294, %v1293
          %v1309 = vpack.c.bf16 %v1296, %v1295
          %v1310 = vpack.c.bf16 %v1298, %v1297
          %v1311 = vpack.c.bf16 %v1300, %v1299
          %v1312 = vpack.c.bf16 %v1302, %v1301
          %v1313 = vpack.c.bf16 %v1304, %v1303
          %v1314 = vpack.c.bf16 %v1306, %v1305
          %v1323 = vunpack.c.l.b16 %v1307
          %v1324 = vunpack.c.h.b16 %v1307
          %v1325 = vunpack.c.l.b16 %v1308
          %v1326 = vunpack.c.h.b16 %v1308
          %v1327 = vunpack.c.l.b16 %v1309
          %v1328 = vunpack.c.h.b16 %v1309
          %v1329 = vunpack.c.l.b16 %v1310
          %v1330 = vunpack.c.h.b16 %v1310
          %v1331 = vunpack.c.l.b16 %v1311
          %v1332 = vunpack.c.h.b16 %v1311
          %v1333 = vunpack.c.l.b16 %v1312
          %v1334 = vunpack.c.h.b16 %v1312
          %v1335 = vunpack.c.l.b16 %v1313
          %v1336 = vunpack.c.h.b16 %v1313
          %v1337 = vunpack.c.l.b16 %v1314
          %v1338 = vunpack.c.h.b16 %v1314
          %v1339 = vpack.c.b16 %v1323, %v1323
          %v1340 = vpack.c.b16 %v1324, %v1324
          %v1341 = vpack.c.b16 %v1325, %v1325
          %v1342 = vpack.c.b16 %v1326, %v1326
          %v1343 = vpack.c.b16 %v1327, %v1327
          %v1344 = vpack.c.b16 %v1328, %v1328
          %v1345 = vpack.c.b16 %v1329, %v1329
          %v1346 = vpack.c.b16 %v1330, %v1330
          %v1347 = vpack.c.b16 %v1331, %v1331
          %v1348 = vpack.c.b16 %v1332, %v1332
          %v1349 = vpack.c.b16 %v1333, %v1333
          %v1350 = vpack.c.b16 %v1334, %v1334
          %v1351 = vpack.c.b16 %v1335, %v1335
          %v1352 = vpack.c.b16 %v1336, %v1336
          %v1353 = vpack.c.b16 %v1337, %v1337
          %v1354 = vpack.c.b16 %v1338, %v1338
          %1371 = vst [vmem:[%s398] sm:$0xf] %v1339
          %1372 = vst [vmem:[%s398 + $0x4] sm:$0xf] %v1340
          %1373 = vst [vmem:[%s398 + $0x8] sm:$0xf] %v1341
          %1374 = vst [vmem:[%s398 + $0xc] sm:$0xf] %v1342
          %1375 = vst [vmem:[%s398 + $0x10] sm:$0xf] %v1343
          %1376 = vst [vmem:[%s398 + $0x14] sm:$0xf] %v1344
          %1377 = vst [vmem:[%s398 + $0x18] sm:$0xf] %v1345
          %1378 = vst [vmem:[%s398 + $0x1c] sm:$0xf] %v1346
          %1379 = vst [vmem:[%s398 + $0x20] sm:$0xf] %v1347
          %1380 = vst [vmem:[%s398 + $0x24] sm:$0xf] %v1348
          %1381 = vst [vmem:[%s398 + $0x28] sm:$0xf] %v1349
          %1382 = vst [vmem:[%s398 + $0x2c] sm:$0xf] %v1350
          %1383 = vst [vmem:[%s398 + $0x30] sm:$0xf] %v1351
          %1384 = vst [vmem:[%s398 + $0x34] sm:$0xf] %v1352
          %1385 = vst [vmem:[%s398 + $0x38] sm:$0xf] %v1353
          %1386 = vst [vmem:[%s398 + $0x3c] sm:$0xf] %v1354
        $region68: #{tpu_custom_call.1} parent=47 // pred_fallthru
          _
        %s1387 = sand.u32 %s214, 1
        %s1388 = scalar_lea.sflag [#allocation5], %s1387
        %s1389 = sand.u32 %s214, 1
        %s1390 = smul.addr %s1389, 64
        %s1391 = scalar_lea.vmem [#allocation9], %s1390
        // Predicated region
        $region69: #{tpu_custom_call.1} parent=47 // pred_check
          %p1392 = pneg %p224
        $region70: #{tpu_custom_call.1} parent=47 // pred_check_branch
          %1394 = sbr.rel (%p1392) target = $region72
        $region71: #{tpu_custom_call.1} parent=47 // pred_region
          %s1395 = smul.u32 16, %s29
          %s1397 = ssub.s32 1024, 1024
          %1398 = vsyncadd %s1388, %s1397
          %s1399 = smul.addr %s1395, 64
          %s1400 = scalar_lea.hbm %s7, %s1399
          %s1401 = sshll.u32 %s1391, 4
          %s1402 = int_to_ptr.vmem [resolvable:$true] %s1401
          %1407 = dma.vmem_to_hbm [thread:$0]  %s1402, 1024, %s1400, %s1388, 64, 64, 4
        $region72: #{tpu_custom_call.1} parent=47 // pred_fallthru
          _
      $region48: #{tpu_custom_call.1} parent=5 // pred_fallthru
        _
      %p1408 = scmp.le.s32.totalorder 2, %s20
      // Predicated region
      $region73: #{tpu_custom_call.1} parent=5 // pred_check
        %p1409 = pneg %p1408
      $region74: #{tpu_custom_call.1} parent=5 // pred_check_branch
        %1411 = sbr.rel (%p1409) target = $region76
      $region75: #{tpu_custom_call.1} parent=5 // pred_region
        %s1412 = ssub.s32 %s20, 2
        // Predicated region
        $region77: #{tpu_custom_call.1} parent=75 // pred_check
          %p1413 = pneg %p230
        $region78: #{tpu_custom_call.1} parent=75 // pred_check_branch
          %1415 = sbr.rel (%p1413) target = $region80
        $region79: #{tpu_custom_call.1} parent=75 // pred_region
          %s1416 = sand.u32 %s215, 1
          %s1417 = scalar_lea.sflag [#allocation5], %s1416
          %s1418 = sand.u32 %s215, 1
          %s1419 = smul.addr %s1418, 64
          %s1420 = scalar_lea.vmem [#allocation9], %s1419
          %1421 = dma.done %s1417, 1024
        $region80: #{tpu_custom_call.1} parent=75 // pred_fallthru
          _
      $region76: #{tpu_custom_call.1} parent=5 // pred_fallthru
        _
    $region6: #{tpu_custom_call.1} parent=1 // loop_footer
      %s24 = sadd.s32 1, %s20
    $region7: #{tpu_custom_call.1} parent=1 // loop_footer_branch
      %19 = sbr.rel target = $region3
    $region8: #{tpu_custom_call.1} parent=1 // loop_exit
      _
    %1422 = vsyncpa [#allocation4], 1
    %s1423 = scalar_lea.sflag [#allocation4], 1
    %1424 = vsyncpa %s1423, 1
    %1425 = vsyncpa [#allocation7], 1
    %1426 = vsyncpa [#allocation5], 1
    %s1427 = scalar_lea.sflag [#allocation5], 1
    %1428 = vsyncpa %s1427, 1

</llo_original>
